<compile_context>
chip_gen: v6e
topology: v6e:2x2x1
jax: 0.10.0
libtpu: 0.0.40
codegen_flags: <defaults>
</compile_context>

<pallas_src>
import jax
import jax.numpy as jnp
from jax import lax
from jax.experimental import pallas as pl
from jax.experimental.pallas import tpu as pltpu

HIDDEN = 50        # real hidden size (PyTorch)
HP = 128           # padded hidden size: one full 128-lane block per gate
INPUT_SIZE = 1
NGATES = 4


def lstm_linear_kernel(x_ref, wih_ref, b_ref, whh_ref, wlin_ref, blin_ref, out_ref):
    """Fused LSTM recurrence + per-step Linear(50,1).

    x_ref    : (T, B, 1)   f32   time-major inputs
    wih_ref  : (1, 4*HP)   f32   W_ih (input_size=1) gate-blocked, zero-padded
    b_ref    : (1, 4*HP)   f32   b_ih + b_hh, gate-blocked, zero-padded
    whh_ref  : (HP, 4*HP)  bf16  W_hh^T, gate-blocked, zero-padded
    wlin_ref : (1, HP)     f32   Linear(50,1) weight, zero-padded
    blin_ref : (1, 1)      f32   Linear bias (SMEM scalar)
    out_ref  : (T, B)      f32   per-timestep scalar output
    """
    T, B, _ = x_ref.shape
    wih = wih_ref[...]            # (1, 4*HP) — small, safe to keep live
    b = b_ref[...]                # (1, 4*HP)
    wlin = wlin_ref[...]          # (1, HP)
    blin = blin_ref[0, 0]         # SMEM scalar

    h0 = jnp.zeros((B, HP), jnp.float32)
    c0 = jnp.zeros((B, HP), jnp.float32)

    def sigmoid(z):
        # Single EUP tanh + cheap VPU scale/shift; avoids exp + divide on the VALU.
        return jnp.tanh(z * 0.5) * 0.5 + 0.5

    def step(t, carry):
        h, c = carry
        # Input projection: independent of h -> hides under previous step's MXU/EUP.
        xg = x_ref[t] * wih + b                                  # (B,1)*(1,4HP) -> (B,4HP)
        # Recurrent matmul: bf16 operands, f32 accumulate; whh streamed from VMEM
        # (not hoisted — 128x512 f32 would occupy the entire register file).
        gates = xg + jnp.dot(h.astype(jnp.bfloat16), whh_ref[...],
                             preferred_element_type=jnp.float32)
        # PyTorch gate order i, f, g, o; each gate is a lane-aligned 128-wide block.
        i_g = sigmoid(gates[:, 0 * HP:1 * HP])
        f_g = sigmoid(gates[:, 1 * HP:2 * HP])
        g_g = jnp.tanh(gates[:, 2 * HP:3 * HP])
        o_g = sigmoid(gates[:, 3 * HP:4 * HP])
        c_new = f_g * c + i_g * g_g
        h_new = o_g * jnp.tanh(c_new)
        # Fused Linear(50,1): XLU lane reduction, off the h/c chain; pad lanes are 0.
        out_ref[t] = jnp.sum(h_new * wlin, axis=-1) + blin       # (B,)
        return (h_new, c_new)

    # T is small & static -> full unroll for cross-iteration scheduling visibility.
    lax.fori_loop(0, T, step, (h0, c0), unroll=True)


def baseline_model_forward(x, params):
    """x: (B, T, 1) float32 -> (B, T, 1) float32 (matches PyTorch forward)."""
    B, T, _ = x.shape
    x_tb = jnp.transpose(x, (1, 0, 2))                                # (T, B, 1) time-major

    vmem = pl.BlockSpec(memory_space=pltpu.MemorySpace.VMEM)
    smem = pl.BlockSpec(memory_space=pltpu.MemorySpace.SMEM)
    out_tb = pl.pallas_call(
        lstm_linear_kernel,
        out_shape=jax.ShapeDtypeStruct((T, B), jnp.float32),
        in_specs=[vmem, vmem, vmem, vmem, vmem, smem],
        out_specs=vmem,
    )(x_tb, params["wih_p"], params["b_p"], params["whh_p"],
      params["wlin_p"], params["blin"])
    return jnp.transpose(out_tb)[:, :, None]                          # (B, T, 1)


def init_raw_params(key):
    """PyTorch-layout params, uniform(-1/sqrt(H), 1/sqrt(H)) like nn.LSTM/nn.Linear."""
    H, I = HIDDEN, INPUT_SIZE
    k = 1.0 / jnp.sqrt(jnp.float32(H))
    keys = jax.random.split(key, 6)
    return {
        "w_ih": jax.random.uniform(keys[0], (4 * H, I), jnp.float32, -k, k),
        "w_hh": jax.random.uniform(keys[1], (4 * H, H), jnp.float32, -k, k),
        "b_ih": jax.random.uniform(keys[2], (4 * H,), jnp.float32, -k, k),
        "b_hh": jax.random.uniform(keys[3], (4 * H,), jnp.float32, -k, k),
        "w_lin": jax.random.uniform(keys[4], (1, HIDDEN), jnp.float32, -k, k),
        "b_lin": jax.random.uniform(keys[5], (1,), jnp.float32, -k, k),
    }


def pack_params(raw):
    """Gate-blocked, lane-aligned, zero-padded layouts for the kernel."""
    H = HIDDEN
    wih_p = jnp.zeros((1, NGATES * HP), jnp.float32)
    b_p = jnp.zeros((1, NGATES * HP), jnp.float32)
    whh_p = jnp.zeros((HP, NGATES * HP), jnp.float32)
    b_comb = raw["b_ih"] + raw["b_hh"]
    for g in range(NGATES):
        src = slice(g * H, (g + 1) * H)
        dst = slice(g * HP, g * HP + H)
        wih_p = wih_p.at[0, dst].set(raw["w_ih"][src, 0])
        b_p = b_p.at[0, dst].set(b_comb[src])
        whh_p = whh_p.at[:H, dst].set(raw["w_hh"][src, :].T)
    wlin_p = jnp.zeros((1, HP), jnp.float32).at[0, :H].set(raw["w_lin"][0, :])
    blin = raw["b_lin"].reshape(1, 1).astype(jnp.float32)
    return {
        "wih_p": wih_p,
        "b_p": b_p,
        "whh_p": whh_p.astype(jnp.bfloat16),   # bf16 recurrent weights (native MXU path)
        "wlin_p": wlin_p,
        "blin": blin,
    }


def reference_forward(x, raw):
    """Pure-JAX reference (PyTorch math, f32, unpadded weights) for correctness check."""
    H = HIDDEN
    B = x.shape[0]
    wih_t = raw["w_ih"].T                        # (I, 4H)
    whh_t = raw["w_hh"].T                        # (H, 4H)
    b = (raw["b_ih"] + raw["b_hh"])[None, :]     # (1, 4H)
    wlin_t = raw["w_lin"].T                      # (H, 1)
    blin = raw["b_lin"][None, :]                 # (1, 1)
    x_tbi = jnp.transpose(x, (1, 0, 2))          # (T, B, I)

    def step(carry, x_t):
        h, c = carry
        gates = x_t @ wih_t + h @ whh_t + b
        i_g = jax.nn.sigmoid(gates[:, 0:H])
        f_g = jax.nn.sigmoid(gates[:, H:2 * H])
        g_g = jnp.tanh(gates[:, 2 * H:3 * H])
        o_g = jax.nn.sigmoid(gates[:, 3 * H:4 * H])
        c_new = f_g * c + i_g * g_g
        h_new = o_g * jnp.tanh(c_new)
        y = h_new @ wlin_t + blin
        return (h_new, c_new), y

    init = (jnp.zeros((B, H), jnp.float32), jnp.zeros((B, H), jnp.float32))
    _, ys = lax.scan(step, init, x_tbi)          # ys: (T, B, 1)
    return jnp.transpose(ys, (1, 0, 2))          # (B, T, 1)


if __name__ == "__main__":
    key = jax.random.PRNGKey(0)
    pkey, xkey = jax.random.split(key)
    raw = init_raw_params(pkey)
    params = pack_params(raw)

    B, T = 2, 8
    x = jax.random.normal(xkey, (B, T, INPUT_SIZE), jnp.float32)

    fwd = jax.jit(baseline_model_forward)
    out = jax.block_until_ready(fwd(x, params))
    ref = jax.block_until_ready(reference_forward(x, raw))

    assert out.shape == (B, T, 1), out.shape
    err = jnp.max(jnp.abs(out - ref))
    # Tolerance allows bf16 recurrent-weight matmul (f32 accumulation over K=50 terms).
    assert jnp.allclose(out, ref, atol=3e-3, rtol=3e-3), f"max abs err {err}"
    print("KERNEL_OK")
</pallas_src>

<mosaic_0001>
module attributes {stable_mosaic.version = 11 : i64} {
  func.func @lstm_linear_kernel(%arg0: memref<8x2x1xf32, #tpu.memory_space<vmem>>, %arg1: memref<1x512xf32, #tpu.memory_space<vmem>>, %arg2: memref<1x512xf32, #tpu.memory_space<vmem>>, %arg3: memref<128x512xbf16, #tpu.memory_space<vmem>>, %arg4: memref<1x128xf32, #tpu.memory_space<vmem>>, %arg5: memref<1x1xf32, #tpu.memory_space<smem>>, %arg6: memref<8x2xf32, #tpu.memory_space<vmem>>) attributes {dimension_semantics = [], scalar_prefetch = 0 : i64, scratch_operands = 0 : i64, tpu.core_type = #tpu.core_type<tc>} {
    %c0 = arith.constant 0 : index
    %c0_0 = arith.constant 0 : index
    %0 = vector.load %arg1[%c0, %c0_0] : memref<1x512xf32, #tpu.memory_space<vmem>>, vector<1x512xf32>
    %c0_1 = arith.constant 0 : index
    %c0_2 = arith.constant 0 : index
    %1 = vector.load %arg2[%c0_1, %c0_2] : memref<1x512xf32, #tpu.memory_space<vmem>>, vector<1x512xf32>
    %c0_3 = arith.constant 0 : index
    %c0_4 = arith.constant 0 : index
    %2 = vector.load %arg4[%c0_3, %c0_4] : memref<1x128xf32, #tpu.memory_space<vmem>>, vector<1x128xf32>
    %c0_5 = arith.constant 0 : index
    %c0_6 = arith.constant 0 : index
    %3 = memref.load %arg5[%c0_5, %c0_6] : memref<1x1xf32, #tpu.memory_space<smem>>
    %cst = arith.constant 0.000000e+00 : f32
    %4 = vector.broadcast %cst : f32 to vector<2x128xf32>
    %cst_7 = arith.constant 0.000000e+00 : f32
    %5 = vector.broadcast %cst_7 : f32 to vector<2x128xf32>
    %c0_i32 = arith.constant 0 : i32
    %6 = arith.index_cast %c0_i32 : i32 to index
    %c0_8 = arith.constant 0 : index
    %c0_9 = arith.constant 0 : index
    %7 = vector.load %arg0[%6, %c0_8, %c0_9] : memref<8x2x1xf32, #tpu.memory_space<vmem>>, vector<1x2x1xf32>
    %8 = vector.shape_cast %7 : vector<1x2x1xf32> to vector<2x1xf32>
    %9 = vector.broadcast %8 : vector<2x1xf32> to vector<2x512xf32>
    %10 = vector.broadcast %0 : vector<1x512xf32> to vector<2x512xf32>
    %11 = arith.mulf %9, %10 : vector<2x512xf32>
    %12 = vector.broadcast %1 : vector<1x512xf32> to vector<2x512xf32>
    %13 = arith.addf %11, %12 : vector<2x512xf32>
    %14 = arith.truncf %4 : vector<2x128xf32> to vector<2x128xbf16>
    %c0_10 = arith.constant 0 : index
    %c0_11 = arith.constant 0 : index
    %15 = vector.load %arg3[%c0_10, %c0_11] : memref<128x512xbf16, #tpu.memory_space<vmem>>, vector<128x512xbf16>
    %cst_12 = arith.constant dense<0.000000e+00> : vector<2x512xf32>
    %16 = tpu.matmul %14, %15, %cst_12 {dimension_numbers = #tpu.dot_dimension_numbers<[1], [0], [0], [1], [0, 0, 1, 1], [], []>} : vector<2x128xbf16>, vector<128x512xbf16>, vector<2x512xf32> -> vector<2x512xf32>
    %17 = arith.addf %13, %16 : vector<2x512xf32>
    %18 = vector.extract_strided_slice %17 {offsets = [0, 0], sizes = [2, 128], strides = [1, 1]} : vector<2x512xf32> to vector<2x128xf32>
    %cst_13 = arith.constant 5.000000e-01 : f32
    %19 = vector.broadcast %cst_13 : f32 to vector<2x128xf32>
    %20 = arith.mulf %18, %19 : vector<2x128xf32>
    %21 = math.tanh %20 : vector<2x128xf32>
    %cst_14 = arith.constant 5.000000e-01 : f32
    %22 = vector.broadcast %cst_14 : f32 to vector<2x128xf32>
    %23 = arith.mulf %21, %22 : vector<2x128xf32>
    %cst_15 = arith.constant 5.000000e-01 : f32
    %24 = vector.broadcast %cst_15 : f32 to vector<2x128xf32>
    %25 = arith.addf %23, %24 : vector<2x128xf32>
    %26 = vector.extract_strided_slice %17 {offsets = [0, 128], sizes = [2, 128], strides = [1, 1]} : vector<2x512xf32> to vector<2x128xf32>
    %cst_16 = arith.constant 5.000000e-01 : f32
    %27 = vector.broadcast %cst_16 : f32 to vector<2x128xf32>
    %28 = arith.mulf %26, %27 : vector<2x128xf32>
    %29 = math.tanh %28 : vector<2x128xf32>
    %cst_17 = arith.constant 5.000000e-01 : f32
    %30 = vector.broadcast %cst_17 : f32 to vector<2x128xf32>
    %31 = arith.mulf %29, %30 : vector<2x128xf32>
    %cst_18 = arith.constant 5.000000e-01 : f32
    %32 = vector.broadcast %cst_18 : f32 to vector<2x128xf32>
    %33 = arith.addf %31, %32 : vector<2x128xf32>
    %34 = vector.extract_strided_slice %17 {offsets = [0, 256], sizes = [2, 128], strides = [1, 1]} : vector<2x512xf32> to vector<2x128xf32>
    %35 = math.tanh %34 : vector<2x128xf32>
    %36 = vector.extract_strided_slice %17 {offsets = [0, 384], sizes = [2, 128], strides = [1, 1]} : vector<2x512xf32> to vector<2x128xf32>
    %cst_19 = arith.constant 5.000000e-01 : f32
    %37 = vector.broadcast %cst_19 : f32 to vector<2x128xf32>
    %38 = arith.mulf %36, %37 : vector<2x128xf32>
    %39 = math.tanh %38 : vector<2x128xf32>
    %cst_20 = arith.constant 5.000000e-01 : f32
    %40 = vector.broadcast %cst_20 : f32 to vector<2x128xf32>
    %41 = arith.mulf %39, %40 : vector<2x128xf32>
    %cst_21 = arith.constant 5.000000e-01 : f32
    %42 = vector.broadcast %cst_21 : f32 to vector<2x128xf32>
    %43 = arith.addf %41, %42 : vector<2x128xf32>
    %44 = arith.mulf %33, %5 : vector<2x128xf32>
    %45 = arith.mulf %25, %35 : vector<2x128xf32>
    %46 = arith.addf %44, %45 : vector<2x128xf32>
    %47 = math.tanh %46 : vector<2x128xf32>
    %48 = arith.mulf %43, %47 : vector<2x128xf32>
    %49 = vector.broadcast %2 : vector<1x128xf32> to vector<2x128xf32>
    %50 = arith.mulf %48, %49 : vector<2x128xf32>
    %cst_22 = arith.constant dense<0.000000e+00> : vector<2xf32>
    %51 = vector.multi_reduction <add>, %50, %cst_22 [1] : vector<2x128xf32> to vector<2xf32>
    %52 = vector.broadcast %3 : f32 to vector<2xf32>
    %53 = arith.addf %51, %52 : vector<2xf32>
    %54 = arith.index_cast %c0_i32 : i32 to index
    %c0_23 = arith.constant 0 : index
    %55 = vector.load %arg6[%54, %c0_23] : memref<8x2xf32, #tpu.memory_space<vmem>>, vector<1x2xf32>
    %56 = vector.shape_cast %55 : vector<1x2xf32> to vector<2xf32>
    %57 = vector.shape_cast %53 : vector<2xf32> to vector<1x2xf32>
    tpu.vector_store %arg6[%54, %c0_23], %57 {strides = array<i32>} : memref<8x2xf32, #tpu.memory_space<vmem>>, vector<1x2xf32>,
    %c1_i32 = arith.constant 1 : i32
    %58 = arith.index_cast %c1_i32 : i32 to index
    %c0_24 = arith.constant 0 : index
    %c0_25 = arith.constant 0 : index
    %59 = vector.load %arg0[%58, %c0_24, %c0_25] : memref<8x2x1xf32, #tpu.memory_space<vmem>>, vector<1x2x1xf32>
    %60 = vector.shape_cast %59 : vector<1x2x1xf32> to vector<2x1xf32>
    %61 = vector.broadcast %60 : vector<2x1xf32> to vector<2x512xf32>
    %62 = vector.broadcast %0 : vector<1x512xf32> to vector<2x512xf32>
    %63 = arith.mulf %61, %62 : vector<2x512xf32>
    %64 = vector.broadcast %1 : vector<1x512xf32> to vector<2x512xf32>
    %65 = arith.addf %63, %64 : vector<2x512xf32>
    %66 = arith.truncf %48 : vector<2x128xf32> to vector<2x128xbf16>
    %c0_26 = arith.constant 0 : index
    %c0_27 = arith.constant 0 : index
    %67 = vector.load %arg3[%c0_26, %c0_27] : memref<128x512xbf16, #tpu.memory_space<vmem>>, vector<128x512xbf16>
    %cst_28 = arith.constant dense<0.000000e+00> : vector<2x512xf32>
    %68 = tpu.matmul %66, %67, %cst_28 {dimension_numbers = #tpu.dot_dimension_numbers<[1], [0], [0], [1], [0, 0, 1, 1], [], []>} : vector<2x128xbf16>, vector<128x512xbf16>, vector<2x512xf32> -> vector<2x512xf32>
    %69 = arith.addf %65, %68 : vector<2x512xf32>
    %70 = vector.extract_strided_slice %69 {offsets = [0, 0], sizes = [2, 128], strides = [1, 1]} : vector<2x512xf32> to vector<2x128xf32>
    %cst_29 = arith.constant 5.000000e-01 : f32
    %71 = vector.broadcast %cst_29 : f32 to vector<2x128xf32>
    %72 = arith.mulf %70, %71 : vector<2x128xf32>
    %73 = math.tanh %72 : vector<2x128xf32>
    %cst_30 = arith.constant 5.000000e-01 : f32
    %74 = vector.broadcast %cst_30 : f32 to vector<2x128xf32>
    %75 = arith.mulf %73, %74 : vector<2x128xf32>
    %cst_31 = arith.constant 5.000000e-01 : f32
    %76 = vector.broadcast %cst_31 : f32 to vector<2x128xf32>
    %77 = arith.addf %75, %76 : vector<2x128xf32>
    %78 = vector.extract_strided_slice %69 {offsets = [0, 128], sizes = [2, 128], strides = [1, 1]} : vector<2x512xf32> to vector<2x128xf32>
    %cst_32 = arith.constant 5.000000e-01 : f32
    %79 = vector.broadcast %cst_32 : f32 to vector<2x128xf32>
    %80 = arith.mulf %78, %79 : vector<2x128xf32>
    %81 = math.tanh %80 : vector<2x128xf32>
    %cst_33 = arith.constant 5.000000e-01 : f32
    %82 = vector.broadcast %cst_33 : f32 to vector<2x128xf32>
    %83 = arith.mulf %81, %82 : vector<2x128xf32>
    %cst_34 = arith.constant 5.000000e-01 : f32
    %84 = vector.broadcast %cst_34 : f32 to vector<2x128xf32>
    %85 = arith.addf %83, %84 : vector<2x128xf32>
    %86 = vector.extract_strided_slice %69 {offsets = [0, 256], sizes = [2, 128], strides = [1, 1]} : vector<2x512xf32> to vector<2x128xf32>
    %87 = math.tanh %86 : vector<2x128xf32>
    %88 = vector.extract_strided_slice %69 {offsets = [0, 384], sizes = [2, 128], strides = [1, 1]} : vector<2x512xf32> to vector<2x128xf32>
    %cst_35 = arith.constant 5.000000e-01 : f32
    %89 = vector.broadcast %cst_35 : f32 to vector<2x128xf32>
    %90 = arith.mulf %88, %89 : vector<2x128xf32>
    %91 = math.tanh %90 : vector<2x128xf32>
    %cst_36 = arith.constant 5.000000e-01 : f32
    %92 = vector.broadcast %cst_36 : f32 to vector<2x128xf32>
    %93 = arith.mulf %91, %92 : vector<2x128xf32>
    %cst_37 = arith.constant 5.000000e-01 : f32
    %94 = vector.broadcast %cst_37 : f32 to vector<2x128xf32>
    %95 = arith.addf %93, %94 : vector<2x128xf32>
    %96 = arith.mulf %85, %46 : vector<2x128xf32>
    %97 = arith.mulf %77, %87 : vector<2x128xf32>
    %98 = arith.addf %96, %97 : vector<2x128xf32>
    %99 = math.tanh %98 : vector<2x128xf32>
    %100 = arith.mulf %95, %99 : vector<2x128xf32>
    %101 = vector.broadcast %2 : vector<1x128xf32> to vector<2x128xf32>
    %102 = arith.mulf %100, %101 : vector<2x128xf32>
    %cst_38 = arith.constant dense<0.000000e+00> : vector<2xf32>
    %103 = vector.multi_reduction <add>, %102, %cst_38 [1] : vector<2x128xf32> to vector<2xf32>
    %104 = vector.broadcast %3 : f32 to vector<2xf32>
    %105 = arith.addf %103, %104 : vector<2xf32>
    %106 = arith.index_cast %c1_i32 : i32 to index
    %c0_39 = arith.constant 0 : index
    %107 = vector.load %arg6[%106, %c0_39] : memref<8x2xf32, #tpu.memory_space<vmem>>, vector<1x2xf32>
    %108 = vector.shape_cast %107 : vector<1x2xf32> to vector<2xf32>
    %109 = vector.shape_cast %105 : vector<2xf32> to vector<1x2xf32>
    tpu.vector_store %arg6[%106, %c0_39], %109 {strides = array<i32>} : memref<8x2xf32, #tpu.memory_space<vmem>>, vector<1x2xf32>,
    %c2_i32 = arith.constant 2 : i32
    %110 = arith.index_cast %c2_i32 : i32 to index
    %c0_40 = arith.constant 0 : index
    %c0_41 = arith.constant 0 : index
    %111 = vector.load %arg0[%110, %c0_40, %c0_41] : memref<8x2x1xf32, #tpu.memory_space<vmem>>, vector<1x2x1xf32>
    %112 = vector.shape_cast %111 : vector<1x2x1xf32> to vector<2x1xf32>
    %113 = vector.broadcast %112 : vector<2x1xf32> to vector<2x512xf32>
    %114 = vector.broadcast %0 : vector<1x512xf32> to vector<2x512xf32>
    %115 = arith.mulf %113, %114 : vector<2x512xf32>
    %116 = vector.broadcast %1 : vector<1x512xf32> to vector<2x512xf32>
    %117 = arith.addf %115, %116 : vector<2x512xf32>
    %118 = arith.truncf %100 : vector<2x128xf32> to vector<2x128xbf16>
    %c0_42 = arith.constant 0 : index
    %c0_43 = arith.constant 0 : index
    %119 = vector.load %arg3[%c0_42, %c0_43] : memref<128x512xbf16, #tpu.memory_space<vmem>>, vector<128x512xbf16>
    %cst_44 = arith.constant dense<0.000000e+00> : vector<2x512xf32>
    %120 = tpu.matmul %118, %119, %cst_44 {dimension_numbers = #tpu.dot_dimension_numbers<[1], [0], [0], [1], [0, 0, 1, 1], [], []>} : vector<2x128xbf16>, vector<128x512xbf16>, vector<2x512xf32> -> vector<2x512xf32>
    %121 = arith.addf %117, %120 : vector<2x512xf32>
    %122 = vector.extract_strided_slice %121 {offsets = [0, 0], sizes = [2, 128], strides = [1, 1]} : vector<2x512xf32> to vector<2x128xf32>
    %cst_45 = arith.constant 5.000000e-01 : f32
    %123 = vector.broadcast %cst_45 : f32 to vector<2x128xf32>
    %124 = arith.mulf %122, %123 : vector<2x128xf32>
    %125 = math.tanh %124 : vector<2x128xf32>
    %cst_46 = arith.constant 5.000000e-01 : f32
    %126 = vector.broadcast %cst_46 : f32 to vector<2x128xf32>
    %127 = arith.mulf %125, %126 : vector<2x128xf32>
    %cst_47 = arith.constant 5.000000e-01 : f32
    %128 = vector.broadcast %cst_47 : f32 to vector<2x128xf32>
    %129 = arith.addf %127, %128 : vector<2x128xf32>
    %130 = vector.extract_strided_slice %121 {offsets = [0, 128], sizes = [2, 128], strides = [1, 1]} : vector<2x512xf32> to vector<2x128xf32>
    %cst_48 = arith.constant 5.000000e-01 : f32
    %131 = vector.broadcast %cst_48 : f32 to vector<2x128xf32>
    %132 = arith.mulf %130, %131 : vector<2x128xf32>
    %133 = math.tanh %132 : vector<2x128xf32>
    %cst_49 = arith.constant 5.000000e-01 : f32
    %134 = vector.broadcast %cst_49 : f32 to vector<2x128xf32>
    %135 = arith.mulf %133, %134 : vector<2x128xf32>
    %cst_50 = arith.constant 5.000000e-01 : f32
    %136 = vector.broadcast %cst_50 : f32 to vector<2x128xf32>
    %137 = arith.addf %135, %136 : vector<2x128xf32>
    %138 = vector.extract_strided_slice %121 {offsets = [0, 256], sizes = [2, 128], strides = [1, 1]} : vector<2x512xf32> to vector<2x128xf32>
    %139 = math.tanh %138 : vector<2x128xf32>
    %140 = vector.extract_strided_slice %121 {offsets = [0, 384], sizes = [2, 128], strides = [1, 1]} : vector<2x512xf32> to vector<2x128xf32>
    %cst_51 = arith.constant 5.000000e-01 : f32
    %141 = vector.broadcast %cst_51 : f32 to vector<2x128xf32>
    %142 = arith.mulf %140, %141 : vector<2x128xf32>
    %143 = math.tanh %142 : vector<2x128xf32>
    %cst_52 = arith.constant 5.000000e-01 : f32
    %144 = vector.broadcast %cst_52 : f32 to vector<2x128xf32>
    %145 = arith.mulf %143, %144 : vector<2x128xf32>
    %cst_53 = arith.constant 5.000000e-01 : f32
    %146 = vector.broadcast %cst_53 : f32 to vector<2x128xf32>
    %147 = arith.addf %145, %146 : vector<2x128xf32>
    %148 = arith.mulf %137, %98 : vector<2x128xf32>
    %149 = arith.mulf %129, %139 : vector<2x128xf32>
    %150 = arith.addf %148, %149 : vector<2x128xf32>
    %151 = math.tanh %150 : vector<2x128xf32>
    %152 = arith.mulf %147, %151 : vector<2x128xf32>
    %153 = vector.broadcast %2 : vector<1x128xf32> to vector<2x128xf32>
    %154 = arith.mulf %152, %153 : vector<2x128xf32>
    %cst_54 = arith.constant dense<0.000000e+00> : vector<2xf32>
    %155 = vector.multi_reduction <add>, %154, %cst_54 [1] : vector<2x128xf32> to vector<2xf32>
    %156 = vector.broadcast %3 : f32 to vector<2xf32>
    %157 = arith.addf %155, %156 : vector<2xf32>
    %158 = arith.index_cast %c2_i32 : i32 to index
    %c0_55 = arith.constant 0 : index
    %159 = vector.load %arg6[%158, %c0_55] : memref<8x2xf32, #tpu.memory_space<vmem>>, vector<1x2xf32>
    %160 = vector.shape_cast %159 : vector<1x2xf32> to vector<2xf32>
    %161 = vector.shape_cast %157 : vector<2xf32> to vector<1x2xf32>
    tpu.vector_store %arg6[%158, %c0_55], %161 {strides = array<i32>} : memref<8x2xf32, #tpu.memory_space<vmem>>, vector<1x2xf32>,
    %c3_i32 = arith.constant 3 : i32
    %162 = arith.index_cast %c3_i32 : i32 to index
    %c0_56 = arith.constant 0 : index
    %c0_57 = arith.constant 0 : index
    %163 = vector.load %arg0[%162, %c0_56, %c0_57] : memref<8x2x1xf32, #tpu.memory_space<vmem>>, vector<1x2x1xf32>
    %164 = vector.shape_cast %163 : vector<1x2x1xf32> to vector<2x1xf32>
    %165 = vector.broadcast %164 : vector<2x1xf32> to vector<2x512xf32>
    %166 = vector.broadcast %0 : vector<1x512xf32> to vector<2x512xf32>
    %167 = arith.mulf %165, %166 : vector<2x512xf32>
    %168 = vector.broadcast %1 : vector<1x512xf32> to vector<2x512xf32>
    %169 = arith.addf %167, %168 : vector<2x512xf32>
    %170 = arith.truncf %152 : vector<2x128xf32> to vector<2x128xbf16>
    %c0_58 = arith.constant 0 : index
    %c0_59 = arith.constant 0 : index
    %171 = vector.load %arg3[%c0_58, %c0_59] : memref<128x512xbf16, #tpu.memory_space<vmem>>, vector<128x512xbf16>
    %cst_60 = arith.constant dense<0.000000e+00> : vector<2x512xf32>
    %172 = tpu.matmul %170, %171, %cst_60 {dimension_numbers = #tpu.dot_dimension_numbers<[1], [0], [0], [1], [0, 0, 1, 1], [], []>} : vector<2x128xbf16>, vector<128x512xbf16>, vector<2x512xf32> -> vector<2x512xf32>
    %173 = arith.addf %169, %172 : vector<2x512xf32>
    %174 = vector.extract_strided_slice %173 {offsets = [0, 0], sizes = [2, 128], strides = [1, 1]} : vector<2x512xf32> to vector<2x128xf32>
    %cst_61 = arith.constant 5.000000e-01 : f32
    %175 = vector.broadcast %cst_61 : f32 to vector<2x128xf32>
    %176 = arith.mulf %174, %175 : vector<2x128xf32>
    %177 = math.tanh %176 : vector<2x128xf32>
    %cst_62 = arith.constant 5.000000e-01 : f32
    %178 = vector.broadcast %cst_62 : f32 to vector<2x128xf32>
    %179 = arith.mulf %177, %178 : vector<2x128xf32>
    %cst_63 = arith.constant 5.000000e-01 : f32
    %180 = vector.broadcast %cst_63 : f32 to vector<2x128xf32>
    %181 = arith.addf %179, %180 : vector<2x128xf32>
    %182 = vector.extract_strided_slice %173 {offsets = [0, 128], sizes = [2, 128], strides = [1, 1]} : vector<2x512xf32> to vector<2x128xf32>
    %cst_64 = arith.constant 5.000000e-01 : f32
    %183 = vector.broadcast %cst_64 : f32 to vector<2x128xf32>
    %184 = arith.mulf %182, %183 : vector<2x128xf32>
    %185 = math.tanh %184 : vector<2x128xf32>
    %cst_65 = arith.constant 5.000000e-01 : f32
    %186 = vector.broadcast %cst_65 : f32 to vector<2x128xf32>
    %187 = arith.mulf %185, %186 : vector<2x128xf32>
    %cst_66 = arith.constant 5.000000e-01 : f32
    %188 = vector.broadcast %cst_66 : f32 to vector<2x128xf32>
    %189 = arith.addf %187, %188 : vector<2x128xf32>
    %190 = vector.extract_strided_slice %173 {offsets = [0, 256], sizes = [2, 128], strides = [1, 1]} : vector<2x512xf32> to vector<2x128xf32>
    %191 = math.tanh %190 : vector<2x128xf32>
    %192 = vector.extract_strided_slice %173 {offsets = [0, 384], sizes = [2, 128], strides = [1, 1]} : vector<2x512xf32> to vector<2x128xf32>
    %cst_67 = arith.constant 5.000000e-01 : f32
    %193 = vector.broadcast %cst_67 : f32 to vector<2x128xf32>
    %194 = arith.mulf %192, %193 : vector<2x128xf32>
    %195 = math.tanh %194 : vector<2x128xf32>
    %cst_68 = arith.constant 5.000000e-01 : f32
    %196 = vector.broadcast %cst_68 : f32 to vector<2x128xf32>
    %197 = arith.mulf %195, %196 : vector<2x128xf32>
    %cst_69 = arith.constant 5.000000e-01 : f32
    %198 = vector.broadcast %cst_69 : f32 to vector<2x128xf32>
    %199 = arith.addf %197, %198 : vector<2x128xf32>
    %200 = arith.mulf %189, %150 : vector<2x128xf32>
    %201 = arith.mulf %181, %191 : vector<2x128xf32>
    %202 = arith.addf %200, %201 : vector<2x128xf32>
    %203 = math.tanh %202 : vector<2x128xf32>
    %204 = arith.mulf %199, %203 : vector<2x128xf32>
    %205 = vector.broadcast %2 : vector<1x128xf32> to vector<2x128xf32>
    %206 = arith.mulf %204, %205 : vector<2x128xf32>
    %cst_70 = arith.constant dense<0.000000e+00> : vector<2xf32>
    %207 = vector.multi_reduction <add>, %206, %cst_70 [1] : vector<2x128xf32> to vector<2xf32>
    %208 = vector.broadcast %3 : f32 to vector<2xf32>
    %209 = arith.addf %207, %208 : vector<2xf32>
    %210 = arith.index_cast %c3_i32 : i32 to index
    %c0_71 = arith.constant 0 : index
    %211 = vector.load %arg6[%210, %c0_71] : memref<8x2xf32, #tpu.memory_space<vmem>>, vector<1x2xf32>
    %212 = vector.shape_cast %211 : vector<1x2xf32> to vector<2xf32>
    %213 = vector.shape_cast %209 : vector<2xf32> to vector<1x2xf32>
    tpu.vector_store %arg6[%210, %c0_71], %213 {strides = array<i32>} : memref<8x2xf32, #tpu.memory_space<vmem>>, vector<1x2xf32>,
    %c4_i32 = arith.constant 4 : i32
    %214 = arith.index_cast %c4_i32 : i32 to index
    %c0_72 = arith.constant 0 : index
    %c0_73 = arith.constant 0 : index
    %215 = vector.load %arg0[%214, %c0_72, %c0_73] : memref<8x2x1xf32, #tpu.memory_space<vmem>>, vector<1x2x1xf32>
    %216 = vector.shape_cast %215 : vector<1x2x1xf32> to vector<2x1xf32>
    %217 = vector.broadcast %216 : vector<2x1xf32> to vector<2x512xf32>
    %218 = vector.broadcast %0 : vector<1x512xf32> to vector<2x512xf32>
    %219 = arith.mulf %217, %218 : vector<2x512xf32>
    %220 = vector.broadcast %1 : vector<1x512xf32> to vector<2x512xf32>
    %221 = arith.addf %219, %220 : vector<2x512xf32>
    %222 = arith.truncf %204 : vector<2x128xf32> to vector<2x128xbf16>
    %c0_74 = arith.constant 0 : index
    %c0_75 = arith.constant 0 : index
    %223 = vector.load %arg3[%c0_74, %c0_75] : memref<128x512xbf16, #tpu.memory_space<vmem>>, vector<128x512xbf16>
    %cst_76 = arith.constant dense<0.000000e+00> : vector<2x512xf32>
    %224 = tpu.matmul %222, %223, %cst_76 {dimension_numbers = #tpu.dot_dimension_numbers<[1], [0], [0], [1], [0, 0, 1, 1], [], []>} : vector<2x128xbf16>, vector<128x512xbf16>, vector<2x512xf32> -> vector<2x512xf32>
    %225 = arith.addf %221, %224 : vector<2x512xf32>
    %226 = vector.extract_strided_slice %225 {offsets = [0, 0], sizes = [2, 128], strides = [1, 1]} : vector<2x512xf32> to vector<2x128xf32>
    %cst_77 = arith.constant 5.000000e-01 : f32
    %227 = vector.broadcast %cst_77 : f32 to vector<2x128xf32>
    %228 = arith.mulf %226, %227 : vector<2x128xf32>
    %229 = math.tanh %228 : vector<2x128xf32>
    %cst_78 = arith.constant 5.000000e-01 : f32
    %230 = vector.broadcast %cst_78 : f32 to vector<2x128xf32>
    %231 = arith.mulf %229, %230 : vector<2x128xf32>
    %cst_79 = arith.constant 5.000000e-01 : f32
    %232 = vector.broadcast %cst_79 : f32 to vector<2x128xf32>
    %233 = arith.addf %231, %232 : vector<2x128xf32>
    %234 = vector.extract_strided_slice %225 {offsets = [0, 128], sizes = [2, 128], strides = [1, 1]} : vector<2x512xf32> to vector<2x128xf32>
    %cst_80 = arith.constant 5.000000e-01 : f32
    %235 = vector.broadcast %cst_80 : f32 to vector<2x128xf32>
    %236 = arith.mulf %234, %235 : vector<2x128xf32>
    %237 = math.tanh %236 : vector<2x128xf32>
    %cst_81 = arith.constant 5.000000e-01 : f32
    %238 = vector.broadcast %cst_81 : f32 to vector<2x128xf32>
    %239 = arith.mulf %237, %238 : vector<2x128xf32>
    %cst_82 = arith.constant 5.000000e-01 : f32
    %240 = vector.broadcast %cst_82 : f32 to vector<2x128xf32>
    %241 = arith.addf %239, %240 : vector<2x128xf32>
    %242 = vector.extract_strided_slice %225 {offsets = [0, 256], sizes = [2, 128], strides = [1, 1]} : vector<2x512xf32> to vector<2x128xf32>
    %243 = math.tanh %242 : vector<2x128xf32>
    %244 = vector.extract_strided_slice %225 {offsets = [0, 384], sizes = [2, 128], strides = [1, 1]} : vector<2x512xf32> to vector<2x128xf32>
    %cst_83 = arith.constant 5.000000e-01 : f32
    %245 = vector.broadcast %cst_83 : f32 to vector<2x128xf32>
    %246 = arith.mulf %244, %245 : vector<2x128xf32>
    %247 = math.tanh %246 : vector<2x128xf32>
    %cst_84 = arith.constant 5.000000e-01 : f32
    %248 = vector.broadcast %cst_84 : f32 to vector<2x128xf32>
    %249 = arith.mulf %247, %248 : vector<2x128xf32>
    %cst_85 = arith.constant 5.000000e-01 : f32
    %250 = vector.broadcast %cst_85 : f32 to vector<2x128xf32>
    %251 = arith.addf %249, %250 : vector<2x128xf32>
    %252 = arith.mulf %241, %202 : vector<2x128xf32>
    %253 = arith.mulf %233, %243 : vector<2x128xf32>
    %254 = arith.addf %252, %253 : vector<2x128xf32>
    %255 = math.tanh %254 : vector<2x128xf32>
    %256 = arith.mulf %251, %255 : vector<2x128xf32>
    %257 = vector.broadcast %2 : vector<1x128xf32> to vector<2x128xf32>
    %258 = arith.mulf %256, %257 : vector<2x128xf32>
    %cst_86 = arith.constant dense<0.000000e+00> : vector<2xf32>
    %259 = vector.multi_reduction <add>, %258, %cst_86 [1] : vector<2x128xf32> to vector<2xf32>
    %260 = vector.broadcast %3 : f32 to vector<2xf32>
    %261 = arith.addf %259, %260 : vector<2xf32>
    %262 = arith.index_cast %c4_i32 : i32 to index
    %c0_87 = arith.constant 0 : index
    %263 = vector.load %arg6[%262, %c0_87] : memref<8x2xf32, #tpu.memory_space<vmem>>, vector<1x2xf32>
    %264 = vector.shape_cast %263 : vector<1x2xf32> to vector<2xf32>
    %265 = vector.shape_cast %261 : vector<2xf32> to vector<1x2xf32>
    tpu.vector_store %arg6[%262, %c0_87], %265 {strides = array<i32>} : memref<8x2xf32, #tpu.memory_space<vmem>>, vector<1x2xf32>,
    %c5_i32 = arith.constant 5 : i32
    %266 = arith.index_cast %c5_i32 : i32 to index
    %c0_88 = arith.constant 0 : index
    %c0_89 = arith.constant 0 : index
    %267 = vector.load %arg0[%266, %c0_88, %c0_89] : memref<8x2x1xf32, #tpu.memory_space<vmem>>, vector<1x2x1xf32>
    %268 = vector.shape_cast %267 : vector<1x2x1xf32> to vector<2x1xf32>
    %269 = vector.broadcast %268 : vector<2x1xf32> to vector<2x512xf32>
    %270 = vector.broadcast %0 : vector<1x512xf32> to vector<2x512xf32>
    %271 = arith.mulf %269, %270 : vector<2x512xf32>
    %272 = vector.broadcast %1 : vector<1x512xf32> to vector<2x512xf32>
    %273 = arith.addf %271, %272 : vector<2x512xf32>
    %274 = arith.truncf %256 : vector<2x128xf32> to vector<2x128xbf16>
    %c0_90 = arith.constant 0 : index
    %c0_91 = arith.constant 0 : index
    %275 = vector.load %arg3[%c0_90, %c0_91] : memref<128x512xbf16, #tpu.memory_space<vmem>>, vector<128x512xbf16>
    %cst_92 = arith.constant dense<0.000000e+00> : vector<2x512xf32>
    %276 = tpu.matmul %274, %275, %cst_92 {dimension_numbers = #tpu.dot_dimension_numbers<[1], [0], [0], [1], [0, 0, 1, 1], [], []>} : vector<2x128xbf16>, vector<128x512xbf16>, vector<2x512xf32> -> vector<2x512xf32>
    %277 = arith.addf %273, %276 : vector<2x512xf32>
    %278 = vector.extract_strided_slice %277 {offsets = [0, 0], sizes = [2, 128], strides = [1, 1]} : vector<2x512xf32> to vector<2x128xf32>
    %cst_93 = arith.constant 5.000000e-01 : f32
    %279 = vector.broadcast %cst_93 : f32 to vector<2x128xf32>
    %280 = arith.mulf %278, %279 : vector<2x128xf32>
    %281 = math.tanh %280 : vector<2x128xf32>
    %cst_94 = arith.constant 5.000000e-01 : f32
    %282 = vector.broadcast %cst_94 : f32 to vector<2x128xf32>
    %283 = arith.mulf %281, %282 : vector<2x128xf32>
    %cst_95 = arith.constant 5.000000e-01 : f32
    %284 = vector.broadcast %cst_95 : f32 to vector<2x128xf32>
    %285 = arith.addf %283, %284 : vector<2x128xf32>
    %286 = vector.extract_strided_slice %277 {offsets = [0, 128], sizes = [2, 128], strides = [1, 1]} : vector<2x512xf32> to vector<2x128xf32>
    %cst_96 = arith.constant 5.000000e-01 : f32
    %287 = vector.broadcast %cst_96 : f32 to vector<2x128xf32>
    %288 = arith.mulf %286, %287 : vector<2x128xf32>
    %289 = math.tanh %288 : vector<2x128xf32>
    %cst_97 = arith.constant 5.000000e-01 : f32
    %290 = vector.broadcast %cst_97 : f32 to vector<2x128xf32>
    %291 = arith.mulf %289, %290 : vector<2x128xf32>
    %cst_98 = arith.constant 5.000000e-01 : f32
    %292 = vector.broadcast %cst_98 : f32 to vector<2x128xf32>
    %293 = arith.addf %291, %292 : vector<2x128xf32>
    %294 = vector.extract_strided_slice %277 {offsets = [0, 256], sizes = [2, 128], strides = [1, 1]} : vector<2x512xf32> to vector<2x128xf32>
    %295 = math.tanh %294 : vector<2x128xf32>
    %296 = vector.extract_strided_slice %277 {offsets = [0, 384], sizes = [2, 128], strides = [1, 1]} : vector<2x512xf32> to vector<2x128xf32>
    %cst_99 = arith.constant 5.000000e-01 : f32
    %297 = vector.broadcast %cst_99 : f32 to vector<2x128xf32>
    %298 = arith.mulf %296, %297 : vector<2x128xf32>
    %299 = math.tanh %298 : vector<2x128xf32>
    %cst_100 = arith.constant 5.000000e-01 : f32
    %300 = vector.broadcast %cst_100 : f32 to vector<2x128xf32>
    %301 = arith.mulf %299, %300 : vector<2x128xf32>
    %cst_101 = arith.constant 5.000000e-01 : f32
    %302 = vector.broadcast %cst_101 : f32 to vector<2x128xf32>
    %303 = arith.addf %301, %302 : vector<2x128xf32>
    %304 = arith.mulf %293, %254 : vector<2x128xf32>
    %305 = arith.mulf %285, %295 : vector<2x128xf32>
    %306 = arith.addf %304, %305 : vector<2x128xf32>
    %307 = math.tanh %306 : vector<2x128xf32>
    %308 = arith.mulf %303, %307 : vector<2x128xf32>
    %309 = vector.broadcast %2 : vector<1x128xf32> to vector<2x128xf32>
    %310 = arith.mulf %308, %309 : vector<2x128xf32>
    %cst_102 = arith.constant dense<0.000000e+00> : vector<2xf32>
    %311 = vector.multi_reduction <add>, %310, %cst_102 [1] : vector<2x128xf32> to vector<2xf32>
    %312 = vector.broadcast %3 : f32 to vector<2xf32>
    %313 = arith.addf %311, %312 : vector<2xf32>
    %314 = arith.index_cast %c5_i32 : i32 to index
    %c0_103 = arith.constant 0 : index
    %315 = vector.load %arg6[%314, %c0_103] : memref<8x2xf32, #tpu.memory_space<vmem>>, vector<1x2xf32>
    %316 = vector.shape_cast %315 : vector<1x2xf32> to vector<2xf32>
    %317 = vector.shape_cast %313 : vector<2xf32> to vector<1x2xf32>
    tpu.vector_store %arg6[%314, %c0_103], %317 {strides = array<i32>} : memref<8x2xf32, #tpu.memory_space<vmem>>, vector<1x2xf32>,
    %c6_i32 = arith.constant 6 : i32
    %318 = arith.index_cast %c6_i32 : i32 to index
    %c0_104 = arith.constant 0 : index
    %c0_105 = arith.constant 0 : index
    %319 = vector.load %arg0[%318, %c0_104, %c0_105] : memref<8x2x1xf32, #tpu.memory_space<vmem>>, vector<1x2x1xf32>
    %320 = vector.shape_cast %319 : vector<1x2x1xf32> to vector<2x1xf32>
    %321 = vector.broadcast %320 : vector<2x1xf32> to vector<2x512xf32>
    %322 = vector.broadcast %0 : vector<1x512xf32> to vector<2x512xf32>
    %323 = arith.mulf %321, %322 : vector<2x512xf32>
    %324 = vector.broadcast %1 : vector<1x512xf32> to vector<2x512xf32>
    %325 = arith.addf %323, %324 : vector<2x512xf32>
    %326 = arith.truncf %308 : vector<2x128xf32> to vector<2x128xbf16>
    %c0_106 = arith.constant 0 : index
    %c0_107 = arith.constant 0 : index
    %327 = vector.load %arg3[%c0_106, %c0_107] : memref<128x512xbf16, #tpu.memory_space<vmem>>, vector<128x512xbf16>
    %cst_108 = arith.constant dense<0.000000e+00> : vector<2x512xf32>
    %328 = tpu.matmul %326, %327, %cst_108 {dimension_numbers = #tpu.dot_dimension_numbers<[1], [0], [0], [1], [0, 0, 1, 1], [], []>} : vector<2x128xbf16>, vector<128x512xbf16>, vector<2x512xf32> -> vector<2x512xf32>
    %329 = arith.addf %325, %328 : vector<2x512xf32>
    %330 = vector.extract_strided_slice %329 {offsets = [0, 0], sizes = [2, 128], strides = [1, 1]} : vector<2x512xf32> to vector<2x128xf32>
    %cst_109 = arith.constant 5.000000e-01 : f32
    %331 = vector.broadcast %cst_109 : f32 to vector<2x128xf32>
    %332 = arith.mulf %330, %331 : vector<2x128xf32>
    %333 = math.tanh %332 : vector<2x128xf32>
    %cst_110 = arith.constant 5.000000e-01 : f32
    %334 = vector.broadcast %cst_110 : f32 to vector<2x128xf32>
    %335 = arith.mulf %333, %334 : vector<2x128xf32>
    %cst_111 = arith.constant 5.000000e-01 : f32
    %336 = vector.broadcast %cst_111 : f32 to vector<2x128xf32>
    %337 = arith.addf %335, %336 : vector<2x128xf32>
    %338 = vector.extract_strided_slice %329 {offsets = [0, 128], sizes = [2, 128], strides = [1, 1]} : vector<2x512xf32> to vector<2x128xf32>
    %cst_112 = arith.constant 5.000000e-01 : f32
    %339 = vector.broadcast %cst_112 : f32 to vector<2x128xf32>
    %340 = arith.mulf %338, %339 : vector<2x128xf32>
    %341 = math.tanh %340 : vector<2x128xf32>
    %cst_113 = arith.constant 5.000000e-01 : f32
    %342 = vector.broadcast %cst_113 : f32 to vector<2x128xf32>
    %343 = arith.mulf %341, %342 : vector<2x128xf32>
    %cst_114 = arith.constant 5.000000e-01 : f32
    %344 = vector.broadcast %cst_114 : f32 to vector<2x128xf32>
    %345 = arith.addf %343, %344 : vector<2x128xf32>
    %346 = vector.extract_strided_slice %329 {offsets = [0, 256], sizes = [2, 128], strides = [1, 1]} : vector<2x512xf32> to vector<2x128xf32>
    %347 = math.tanh %346 : vector<2x128xf32>
    %348 = vector.extract_strided_slice %329 {offsets = [0, 384], sizes = [2, 128], strides = [1, 1]} : vector<2x512xf32> to vector<2x128xf32>
    %cst_115 = arith.constant 5.000000e-01 : f32
    %349 = vector.broadcast %cst_115 : f32 to vector<2x128xf32>
    %350 = arith.mulf %348, %349 : vector<2x128xf32>
    %351 = math.tanh %350 : vector<2x128xf32>
    %cst_116 = arith.constant 5.000000e-01 : f32
    %352 = vector.broadcast %cst_116 : f32 to vector<2x128xf32>
    %353 = arith.mulf %351, %352 : vector<2x128xf32>
    %cst_117 = arith.constant 5.000000e-01 : f32
    %354 = vector.broadcast %cst_117 : f32 to vector<2x128xf32>
    %355 = arith.addf %353, %354 : vector<2x128xf32>
    %356 = arith.mulf %345, %306 : vector<2x128xf32>
    %357 = arith.mulf %337, %347 : vector<2x128xf32>
    %358 = arith.addf %356, %357 : vector<2x128xf32>
    %359 = math.tanh %358 : vector<2x128xf32>
    %360 = arith.mulf %355, %359 : vector<2x128xf32>
    %361 = vector.broadcast %2 : vector<1x128xf32> to vector<2x128xf32>
    %362 = arith.mulf %360, %361 : vector<2x128xf32>
    %cst_118 = arith.constant dense<0.000000e+00> : vector<2xf32>
    %363 = vector.multi_reduction <add>, %362, %cst_118 [1] : vector<2x128xf32> to vector<2xf32>
    %364 = vector.broadcast %3 : f32 to vector<2xf32>
    %365 = arith.addf %363, %364 : vector<2xf32>
    %366 = arith.index_cast %c6_i32 : i32 to index
    %c0_119 = arith.constant 0 : index
    %367 = vector.load %arg6[%366, %c0_119] : memref<8x2xf32, #tpu.memory_space<vmem>>, vector<1x2xf32>
    %368 = vector.shape_cast %367 : vector<1x2xf32> to vector<2xf32>
    %369 = vector.shape_cast %365 : vector<2xf32> to vector<1x2xf32>
    tpu.vector_store %arg6[%366, %c0_119], %369 {strides = array<i32>} : memref<8x2xf32, #tpu.memory_space<vmem>>, vector<1x2xf32>,
    %c7_i32 = arith.constant 7 : i32
    %370 = arith.index_cast %c7_i32 : i32 to index
    %c0_120 = arith.constant 0 : index
    %c0_121 = arith.constant 0 : index
    %371 = vector.load %arg0[%370, %c0_120, %c0_121] : memref<8x2x1xf32, #tpu.memory_space<vmem>>, vector<1x2x1xf32>
    %372 = vector.shape_cast %371 : vector<1x2x1xf32> to vector<2x1xf32>
    %373 = vector.broadcast %372 : vector<2x1xf32> to vector<2x512xf32>
    %374 = vector.broadcast %0 : vector<1x512xf32> to vector<2x512xf32>
    %375 = arith.mulf %373, %374 : vector<2x512xf32>
    %376 = vector.broadcast %1 : vector<1x512xf32> to vector<2x512xf32>
    %377 = arith.addf %375, %376 : vector<2x512xf32>
    %378 = arith.truncf %360 : vector<2x128xf32> to vector<2x128xbf16>
    %c0_122 = arith.constant 0 : index
    %c0_123 = arith.constant 0 : index
    %379 = vector.load %arg3[%c0_122, %c0_123] : memref<128x512xbf16, #tpu.memory_space<vmem>>, vector<128x512xbf16>
    %cst_124 = arith.constant dense<0.000000e+00> : vector<2x512xf32>
    %380 = tpu.matmul %378, %379, %cst_124 {dimension_numbers = #tpu.dot_dimension_numbers<[1], [0], [0], [1], [0, 0, 1, 1], [], []>} : vector<2x128xbf16>, vector<128x512xbf16>, vector<2x512xf32> -> vector<2x512xf32>
    %381 = arith.addf %377, %380 : vector<2x512xf32>
    %382 = vector.extract_strided_slice %381 {offsets = [0, 0], sizes = [2, 128], strides = [1, 1]} : vector<2x512xf32> to vector<2x128xf32>
    %cst_125 = arith.constant 5.000000e-01 : f32
    %383 = vector.broadcast %cst_125 : f32 to vector<2x128xf32>
    %384 = arith.mulf %382, %383 : vector<2x128xf32>
    %385 = math.tanh %384 : vector<2x128xf32>
    %cst_126 = arith.constant 5.000000e-01 : f32
    %386 = vector.broadcast %cst_126 : f32 to vector<2x128xf32>
    %387 = arith.mulf %385, %386 : vector<2x128xf32>
    %cst_127 = arith.constant 5.000000e-01 : f32
    %388 = vector.broadcast %cst_127 : f32 to vector<2x128xf32>
    %389 = arith.addf %387, %388 : vector<2x128xf32>
    %390 = vector.extract_strided_slice %381 {offsets = [0, 128], sizes = [2, 128], strides = [1, 1]} : vector<2x512xf32> to vector<2x128xf32>
    %cst_128 = arith.constant 5.000000e-01 : f32
    %391 = vector.broadcast %cst_128 : f32 to vector<2x128xf32>
    %392 = arith.mulf %390, %391 : vector<2x128xf32>
    %393 = math.tanh %392 : vector<2x128xf32>
    %cst_129 = arith.constant 5.000000e-01 : f32
    %394 = vector.broadcast %cst_129 : f32 to vector<2x128xf32>
    %395 = arith.mulf %393, %394 : vector<2x128xf32>
    %cst_130 = arith.constant 5.000000e-01 : f32
    %396 = vector.broadcast %cst_130 : f32 to vector<2x128xf32>
    %397 = arith.addf %395, %396 : vector<2x128xf32>
    %398 = vector.extract_strided_slice %381 {offsets = [0, 256], sizes = [2, 128], strides = [1, 1]} : vector<2x512xf32> to vector<2x128xf32>
    %399 = math.tanh %398 : vector<2x128xf32>
    %400 = vector.extract_strided_slice %381 {offsets = [0, 384], sizes = [2, 128], strides = [1, 1]} : vector<2x512xf32> to vector<2x128xf32>
    %cst_131 = arith.constant 5.000000e-01 : f32
    %401 = vector.broadcast %cst_131 : f32 to vector<2x128xf32>
    %402 = arith.mulf %400, %401 : vector<2x128xf32>
    %403 = math.tanh %402 : vector<2x128xf32>
    %cst_132 = arith.constant 5.000000e-01 : f32
    %404 = vector.broadcast %cst_132 : f32 to vector<2x128xf32>
    %405 = arith.mulf %403, %404 : vector<2x128xf32>
    %cst_133 = arith.constant 5.000000e-01 : f32
    %406 = vector.broadcast %cst_133 : f32 to vector<2x128xf32>
    %407 = arith.addf %405, %406 : vector<2x128xf32>
    %408 = arith.mulf %397, %358 : vector<2x128xf32>
    %409 = arith.mulf %389, %399 : vector<2x128xf32>
    %410 = arith.addf %408, %409 : vector<2x128xf32>
    %411 = math.tanh %410 : vector<2x128xf32>
    %412 = arith.mulf %407, %411 : vector<2x128xf32>
    %413 = vector.broadcast %2 : vector<1x128xf32> to vector<2x128xf32>
    %414 = arith.mulf %412, %413 : vector<2x128xf32>
    %cst_134 = arith.constant dense<0.000000e+00> : vector<2xf32>
    %415 = vector.multi_reduction <add>, %414, %cst_134 [1] : vector<2x128xf32> to vector<2xf32>
    %416 = vector.broadcast %3 : f32 to vector<2xf32>
    %417 = arith.addf %415, %416 : vector<2xf32>
    %418 = arith.index_cast %c7_i32 : i32 to index
    %c0_135 = arith.constant 0 : index
    %419 = vector.load %arg6[%418, %c0_135] : memref<8x2xf32, #tpu.memory_space<vmem>>, vector<1x2xf32>
    %420 = vector.shape_cast %419 : vector<1x2xf32> to vector<2xf32>
    %421 = vector.shape_cast %417 : vector<2xf32> to vector<1x2xf32>
    tpu.vector_store %arg6[%418, %c0_135], %421 {strides = array<i32>} : memref<8x2xf32, #tpu.memory_space<vmem>>, vector<1x2xf32>,
    %c8_i32 = arith.constant 8 : i32
    return
  }
}

</mosaic_0001>

<llo_original>
// kernel: baseline_model_forward.1
$region0: #{baseline_model_forward.1}
  #allocation0 [shape = 'u32[]', space=smem, size = 0x4, offset = 0x4, fixed_abs, tag = 'smem constant byte address 0x4 - core index']
  #allocation1 [shape = 'u32[144,128]{1,0:T(1,128)}', space=vmem, size = 0x12000, scoped, tag = 'internal scratch']
  #allocation2 [shape = 'f32[1,1]{1,0:T(1,128)S(6)}', space=smem, size = 0x200, scoped, tag = 'scoped memory for baseline_model_forward.1']
  %s0 = inlined_call_operand.vmem [shape: f32[8,2,1], index: 0, kind: input, shape index: {}]
  %s1 = inlined_call_operand.vmem [shape: f32[1,512], index: 1, kind: input, shape index: {}]
  %s2 = inlined_call_operand.vmem [shape: f32[1,512], index: 2, kind: input, shape index: {}]
  %s3 = inlined_call_operand.hbm [shape: bf16[128,512], index: 3, kind: input, shape index: {}]
  %s4 = inlined_call_operand.vmem [shape: f32[1,128], index: 4, kind: input, shape index: {}]
  %s5 = inlined_call_operand.<no memory space> [shape: f32[1,1], index: 5, kind: input, shape index: {}]
  %s6 = inlined_call_operand.vmem [shape: f32[8,2], index: 6, kind: output, shape index: {}]
  %s7 = sld [smem:[#allocation0]]
  $region38: #{baseline_model_forward.1} parent=0
    _
  %s9 = ssub.s32 1, %s7
  %s10 = scalar_select 0, %s9, %s7
  %11 = sst [smem:[#allocation2]] %s5
  $region1: #{baseline_model_forward.1} parent=0
    #allocation3 [shape = 'u8[131072]{0}', space=vmem, size = 0x20000, scoped, tag = 'input window, operand 3, single buffered']
    #allocation4 [shape = 's32[1]{0}', space=sflag, size = 0x4, scoped, tag = 'scoped memory for baseline_model_forward.1']
    %12 = vsyncpa [#allocation4], 0
    // Predicated region
    $region2: #{baseline_model_forward.1} parent=1 // pred_check
      _
    $region3: #{baseline_model_forward.1} parent=1 // pred_check_branch
      %14 = sbr.rel (0) target = $region5
    $region4: #{baseline_model_forward.1} parent=1 // pred_region
      _
    $region5: #{baseline_model_forward.1} parent=1 // pred_fallthru
      _
    // Predicated region
    $region6: #{baseline_model_forward.1} parent=1 // pred_check
      _
    $region7: #{baseline_model_forward.1} parent=1 // pred_check_branch
      %16 = sbr.rel (0) target = $region9
    $region8: #{baseline_model_forward.1} parent=1 // pred_region
      _
    $region9: #{baseline_model_forward.1} parent=1 // pred_fallthru
      _
    // Predicated region
    $region10: #{baseline_model_forward.1} parent=1 // pred_check
      _
    $region11: #{baseline_model_forward.1} parent=1 // pred_check_branch
      %18 = sbr.rel (0) target = $region13
    $region12: #{baseline_model_forward.1} parent=1 // pred_region
      _
    $region13: #{baseline_model_forward.1} parent=1 // pred_fallthru
      _
    // Predicated region
    $region14: #{baseline_model_forward.1} parent=1 // pred_check
      _
    $region15: #{baseline_model_forward.1} parent=1 // pred_check_branch
      %20 = sbr.rel (0) target = $region17
    $region16: #{baseline_model_forward.1} parent=1 // pred_region
      %s22 = ssub.s32 4096, 4096
      %23 = vsyncadd [#allocation4], %s22
      %s24 = sshll.u32 [#allocation3], 4
      %s25 = int_to_ptr.vmem [resolvable:$true] %s24
      %30 = dma.hbm_to_vmem [thread:$0]  %s3, 4096, %s25, [#allocation4], 256, 256, 16
    $region17: #{baseline_model_forward.1} parent=1 // pred_fallthru
      _
    // Predicated region
    $region18: #{baseline_model_forward.1} parent=1 // pred_check
      _
    $region19: #{baseline_model_forward.1} parent=1 // pred_check_branch
      %32 = sbr.rel (0) target = $region21
    $region20: #{baseline_model_forward.1} parent=1 // pred_region
      _
    $region21: #{baseline_model_forward.1} parent=1 // pred_fallthru
      _
    // Predicated region
    $region22: #{baseline_model_forward.1} parent=1 // pred_check
      _
    $region23: #{baseline_model_forward.1} parent=1 // pred_check_branch
      %34 = sbr.rel (0) target = $region25
    $region24: #{baseline_model_forward.1} parent=1 // pred_region
      _
    $region25: #{baseline_model_forward.1} parent=1 // pred_fallthru
      _
    // Predicated region
    $region26: #{baseline_model_forward.1} parent=1 // pred_check
      _
    $region27: #{baseline_model_forward.1} parent=1 // pred_check_branch
      %36 = sbr.rel (0) target = $region29
    $region28: #{baseline_model_forward.1} parent=1 // pred_region
      %37 = dma.done [#allocation4], 4096
    $region29: #{baseline_model_forward.1} parent=1 // pred_fallthru
      _
    %v39 = vld [vmem:[%s1] sm:$0xf]
    %v40 = vld [vmem:[%s2] sm:$0xf]
    %v41 = vld [vmem:[%s4] sm:$0x1]
    %s42 = sld [smem:[#allocation2]]
    %v43 = vld [vmem:[%s0] sm:$0x3]
    %45 = vset.pattern.permute.xlu0 0
    %46 = vperm.xlu0 %45, %v43
    %v47 = vpop.permute.xlu0 %46
    %v50 = vlaneseq
    %v51 = vshrl.u32 %v50, 7
    %v52 = vsub.s32 0, %v51
    %v53 = vrot.slane %v39, %v52
    %v54 = vlaneseq
    %v55 = vshrl.u32 %v54, 7
    %v56 = vsub.s32 1, %v55
    %v57 = vrot.slane %v39, %v56
    %v58 = vlaneseq
    %v59 = vshrl.u32 %v58, 7
    %v60 = vsub.s32 2, %v59
    %v61 = vrot.slane %v39, %v60
    %v62 = vlaneseq
    %v63 = vshrl.u32 %v62, 7
    %v64 = vsub.s32 3, %v63
    %v65 = vrot.slane %v39, %v64
    %v70 = vmul.f32 %v47, %v53
    %v71 = vmul.f32 %v47, %v57
    %v72 = vmul.f32 %v47, %v61
    %v73 = vmul.f32 %v47, %v65
    %v75 = vlaneseq
    %v76 = vshrl.u32 %v75, 7
    %v77 = vsub.s32 0, %v76
    %v78 = vrot.slane %v40, %v77
    %v79 = vlaneseq
    %v80 = vshrl.u32 %v79, 7
    %v81 = vsub.s32 1, %v80
    %v82 = vrot.slane %v40, %v81
    %v83 = vlaneseq
    %v84 = vshrl.u32 %v83, 7
    %v85 = vsub.s32 2, %v84
    %v86 = vrot.slane %v40, %v85
    %v87 = vlaneseq
    %v88 = vshrl.u32 %v87, 7
    %v89 = vsub.s32 3, %v88
    %v90 = vrot.slane %v40, %v89
    %v95 = vadd.f32 %v70, %v78
    %v96 = vadd.f32 %v71, %v82
    %v97 = vadd.f32 %v72, %v86
    %v98 = vadd.f32 %v73, %v90
    %v99 = vld [vmem:[#allocation3] sm:$0xff]
    %v100 = vld [vmem:[#allocation3 + $0x8] sm:$0xff]
    %v101 = vld [vmem:[#allocation3 + $0x10] sm:$0xff]
    %v102 = vld [vmem:[#allocation3 + $0x18] sm:$0xff]
    %v103 = vld [vmem:[#allocation3 + $0x20] sm:$0xff]
    %v104 = vld [vmem:[#allocation3 + $0x28] sm:$0xff]
    %v105 = vld [vmem:[#allocation3 + $0x30] sm:$0xff]
    %v106 = vld [vmem:[#allocation3 + $0x38] sm:$0xff]
    %v107 = vld [vmem:[#allocation3 + $0x40] sm:$0xff]
    %v108 = vld [vmem:[#allocation3 + $0x48] sm:$0xff]
    %v109 = vld [vmem:[#allocation3 + $0x50] sm:$0xff]
    %v110 = vld [vmem:[#allocation3 + $0x58] sm:$0xff]
    %v111 = vld [vmem:[#allocation3 + $0x60] sm:$0xff]
    %v112 = vld [vmem:[#allocation3 + $0x68] sm:$0xff]
    %v113 = vld [vmem:[#allocation3 + $0x70] sm:$0xff]
    %v114 = vld [vmem:[#allocation3 + $0x78] sm:$0xff]
    %v115 = vld [vmem:[#allocation3 + $0x80] sm:$0xff]
    %v116 = vld [vmem:[#allocation3 + $0x88] sm:$0xff]
    %v117 = vld [vmem:[#allocation3 + $0x90] sm:$0xff]
    %v118 = vld [vmem:[#allocation3 + $0x98] sm:$0xff]
    %v119 = vld [vmem:[#allocation3 + $0xa0] sm:$0xff]
    %v120 = vld [vmem:[#allocation3 + $0xa8] sm:$0xff]
    %v121 = vld [vmem:[#allocation3 + $0xb0] sm:$0xff]
    %v122 = vld [vmem:[#allocation3 + $0xb8] sm:$0xff]
    %v123 = vld [vmem:[#allocation3 + $0xc0] sm:$0xff]
    %v124 = vld [vmem:[#allocation3 + $0xc8] sm:$0xff]
    %v125 = vld [vmem:[#allocation3 + $0xd0] sm:$0xff]
    %v126 = vld [vmem:[#allocation3 + $0xd8] sm:$0xff]
    %v127 = vld [vmem:[#allocation3 + $0xe0] sm:$0xff]
    %v128 = vld [vmem:[#allocation3 + $0xe8] sm:$0xff]
    %v129 = vld [vmem:[#allocation3 + $0xf0] sm:$0xff]
    %v130 = vld [vmem:[#allocation3 + $0xf8] sm:$0xff]
    %v163 = vunpack.c.l.b16 %v99
    %v164 = vunpack.c.h.b16 %v99
    %v165 = vunpack.c.l.b16 %v100
    %v166 = vunpack.c.h.b16 %v100
    %v167 = vunpack.c.l.b16 %v101
    %v168 = vunpack.c.h.b16 %v101
    %v169 = vunpack.c.l.b16 %v102
    %v170 = vunpack.c.h.b16 %v102
    %v171 = vunpack.c.l.b16 %v103
    %v172 = vunpack.c.h.b16 %v103
    %v173 = vunpack.c.l.b16 %v104
    %v174 = vunpack.c.h.b16 %v104
    %v175 = vunpack.c.l.b16 %v105
    %v176 = vunpack.c.h.b16 %v105
    %v177 = vunpack.c.l.b16 %v106
    %v178 = vunpack.c.h.b16 %v106
    %v179 = vunpack.c.l.b16 %v107
    %v180 = vunpack.c.h.b16 %v107
    %v181 = vunpack.c.l.b16 %v108
    %v182 = vunpack.c.h.b16 %v108
    %v183 = vunpack.c.l.b16 %v109
    %v184 = vunpack.c.h.b16 %v109
    %v185 = vunpack.c.l.b16 %v110
    %v186 = vunpack.c.h.b16 %v110
    %v187 = vunpack.c.l.b16 %v111
    %v188 = vunpack.c.h.b16 %v111
    %v189 = vunpack.c.l.b16 %v112
    %v190 = vunpack.c.h.b16 %v112
    %v191 = vunpack.c.l.b16 %v113
    %v192 = vunpack.c.h.b16 %v113
    %v193 = vunpack.c.l.b16 %v114
    %v194 = vunpack.c.h.b16 %v114
    %v195 = vunpack.c.l.b16 %v115
    %v196 = vunpack.c.h.b16 %v115
    %v197 = vunpack.c.l.b16 %v116
    %v198 = vunpack.c.h.b16 %v116
    %v199 = vunpack.c.l.b16 %v117
    %v200 = vunpack.c.h.b16 %v117
    %v201 = vunpack.c.l.b16 %v118
    %v202 = vunpack.c.h.b16 %v118
    %v203 = vunpack.c.l.b16 %v119
    %v204 = vunpack.c.h.b16 %v119
    %v205 = vunpack.c.l.b16 %v120
    %v206 = vunpack.c.h.b16 %v120
    %v207 = vunpack.c.l.b16 %v121
    %v208 = vunpack.c.h.b16 %v121
    %v209 = vunpack.c.l.b16 %v122
    %v210 = vunpack.c.h.b16 %v122
    %v211 = vunpack.c.l.b16 %v123
    %v212 = vunpack.c.h.b16 %v123
    %v213 = vunpack.c.l.b16 %v124
    %v214 = vunpack.c.h.b16 %v124
    %v215 = vunpack.c.l.b16 %v125
    %v216 = vunpack.c.h.b16 %v125
    %v217 = vunpack.c.l.b16 %v126
    %v218 = vunpack.c.h.b16 %v126
    %v219 = vunpack.c.l.b16 %v127
    %v220 = vunpack.c.h.b16 %v127
    %v221 = vunpack.c.l.b16 %v128
    %v222 = vunpack.c.h.b16 %v128
    %v223 = vunpack.c.l.b16 %v129
    %v224 = vunpack.c.h.b16 %v129
    %v225 = vunpack.c.l.b16 %v130
    %v226 = vunpack.c.h.b16 %v130
    %v227 = vpack.c.b16 %v167, %v163
    %v228 = vpack.c.b16 %v168, %v164
    %v229 = vpack.c.b16 %v169, %v165
    %v230 = vpack.c.b16 %v170, %v166
    %v231 = vpack.c.b16 %v175, %v171
    %v232 = vpack.c.b16 %v176, %v172
    %v233 = vpack.c.b16 %v177, %v173
    %v234 = vpack.c.b16 %v178, %v174
    %v235 = vpack.c.b16 %v183, %v179
    %v236 = vpack.c.b16 %v184, %v180
    %v237 = vpack.c.b16 %v185, %v181
    %v238 = vpack.c.b16 %v186, %v182
    %v239 = vpack.c.b16 %v191, %v187
    %v240 = vpack.c.b16 %v192, %v188
    %v241 = vpack.c.b16 %v193, %v189
    %v242 = vpack.c.b16 %v194, %v190
    %v243 = vpack.c.b16 %v199, %v195
    %v244 = vpack.c.b16 %v200, %v196
    %v245 = vpack.c.b16 %v201, %v197
    %v246 = vpack.c.b16 %v202, %v198
    %v247 = vpack.c.b16 %v207, %v203
    %v248 = vpack.c.b16 %v208, %v204
    %v249 = vpack.c.b16 %v209, %v205
    %v250 = vpack.c.b16 %v210, %v206
    %v251 = vpack.c.b16 %v215, %v211
    %v252 = vpack.c.b16 %v216, %v212
    %v253 = vpack.c.b16 %v217, %v213
    %v254 = vpack.c.b16 %v218, %v214
    %v255 = vpack.c.b16 %v223, %v219
    %v256 = vpack.c.b16 %v224, %v220
    %v257 = vpack.c.b16 %v225, %v221
    %v258 = vpack.c.b16 %v226, %v222
    %291 = vmatprep.subr.bf16.mxu0 %v256
    %292 = vmatpush1.bf16.msra.mxu0 %v255
    %293 = vmatprep.subr.bf16.mxu0 %v252
    %294 = vmatpush1.bf16.msra.mxu0 %v251
    %295 = vmatprep.subr.bf16.mxu0 %v248
    %296 = vmatpush1.bf16.msra.mxu0 %v247
    %297 = vmatprep.subr.bf16.mxu0 %v244
    %298 = vmatpush1.bf16.msra.mxu0 %v243
    %299 = vmatprep.subr.bf16.mxu0 %v240
    %300 = vmatpush1.bf16.msra.mxu0 %v239
    %301 = vmatprep.subr.bf16.mxu0 %v236
    %302 = vmatpush1.bf16.msra.mxu0 %v235
    %303 = vmatprep.subr.bf16.mxu0 %v232
    %304 = vmatpush1.bf16.msra.mxu0 %v231
    %305 = vmatprep.subr.bf16.mxu0 %v228
    %306 = vmatpush1.bf16.msra.mxu0 %v227
    %307 = vmatprep.subr.bf16.mxu0 0
    %308 = vmatpush2.bf16.msra.mxu0 0
    %309 = vmatprep.subr.bf16.mxu0 0
    %310 = vmatpush2.bf16.msra.mxu0 0
    %311 = vmatprep.subr.bf16.mxu0 0
    %312 = vmatpush2.bf16.msra.mxu0 0
    %313 = vmatprep.subr.bf16.mxu0 0
    %314 = vmatpush2.bf16.msra.mxu0 0
    %315 = vmatprep.subr.bf16.mxu0 0
    %316 = vmatpush2.bf16.msra.mxu0 0
    %317 = vmatprep.subr.bf16.mxu0 0
    %318 = vmatpush2.bf16.msra.mxu0 0
    %319 = vmatprep.subr.bf16.mxu0 0
    %320 = vmatpush2.bf16.msra.mxu0 0
    %321 = vmatprep.subr.bf16.mxu0 0
    %322 = vmatpush2.bf16.msra.mxu0 0
    %323 = vmatprep.mubr.bf16.mxu0 0
    %324 = vmatmul.mubr.bf16.gmra.mxu0 0
    %v325 = vpop.f32.mrf.mxu0
    %v326 = vadd.f32 0.0, %v325
    %v327 = vpop.f32.mrf.mxu0
    %v328 = vadd.f32 0.0, %v327
    %v329 = vpop.f32.mrf.mxu0
    %v330 = vpop.f32.mrf.mxu0
    %331 = vdwg.mxu0
    %332 = vmatprep.subr.bf16.mxu0 %v258
    %333 = vmatpush1.bf16.msra.mxu0 %v257
    %334 = vmatprep.subr.bf16.mxu0 %v254
    %335 = vmatpush1.bf16.msra.mxu0 %v253
    %336 = vmatprep.subr.bf16.mxu0 %v250
    %337 = vmatpush1.bf16.msra.mxu0 %v249
    %338 = vmatprep.subr.bf16.mxu0 %v246
    %339 = vmatpush1.bf16.msra.mxu0 %v245
    %340 = vmatprep.subr.bf16.mxu0 %v242
    %341 = vmatpush1.bf16.msra.mxu0 %v241
    %342 = vmatprep.subr.bf16.mxu0 %v238
    %343 = vmatpush1.bf16.msra.mxu0 %v237
    %344 = vmatprep.subr.bf16.mxu0 %v234
    %345 = vmatpush1.bf16.msra.mxu0 %v233
    %346 = vmatprep.subr.bf16.mxu0 %v230
    %347 = vmatpush1.bf16.msra.mxu0 %v229
    %348 = vmatprep.subr.bf16.mxu0 0
    %349 = vmatpush2.bf16.msra.mxu0 0
    %350 = vmatprep.subr.bf16.mxu0 0
    %351 = vmatpush2.bf16.msra.mxu0 0
    %352 = vmatprep.subr.bf16.mxu0 0
    %353 = vmatpush2.bf16.msra.mxu0 0
    %354 = vmatprep.subr.bf16.mxu0 0
    %355 = vmatpush2.bf16.msra.mxu0 0
    %356 = vmatprep.subr.bf16.mxu0 0
    %357 = vmatpush2.bf16.msra.mxu0 0
    %358 = vmatprep.subr.bf16.mxu0 0
    %359 = vmatpush2.bf16.msra.mxu0 0
    %360 = vmatprep.subr.bf16.mxu0 0
    %361 = vmatpush2.bf16.msra.mxu0 0
    %362 = vmatprep.subr.bf16.mxu0 0
    %363 = vmatpush2.bf16.msra.mxu0 0
    %364 = vmatprep.mubr.bf16.mxu0 0
    %365 = vmatmul.mubr.bf16.gmra.mxu0 0
    %v366 = vpop.f32.mrf.mxu0
    %v367 = vadd.f32 0.0, %v366
    %v368 = vpop.f32.mrf.mxu0
    %v369 = vadd.f32 0.0, %v368
    %v370 = vpop.f32.mrf.mxu0
    %v371 = vpop.f32.mrf.mxu0
    %372 = vdwg.mxu0
    %v373 = vadd.f32 %v95, %v326
    %v374 = vadd.f32 %v96, %v328
    %v375 = vadd.f32 %v97, %v367
    %v376 = vadd.f32 %v98, %v369
    %v377 = vmul.f32 %v373, 0.5
    %v378 = vtanh.pop %v377
    %v379 = vmul.f32 %v378, 0.5
    %v380 = vadd.f32 %v379, 0.5
    %v381 = vmul.f32 %v374, 0.5
    %v382 = vtanh.pop %v381
    %v383 = vmul.f32 %v382, 0.5
    %v384 = vadd.f32 %v383, 0.5
    %v385 = vtanh.pop %v375
    %v386 = vmul.f32 %v376, 0.5
    %v387 = vtanh.pop %v386
    %v388 = vmul.f32 %v387, 0.5
    %v389 = vadd.f32 %v388, 0.5
    %v390 = vmul.f32 %v384, 0.0
    %v391 = vmul.f32 %v380, %v385
    %v392 = vadd.f32 %v390, %v391
    %v393 = vtanh.pop %v392
    %v394 = vmul.f32 %v389, %v393
    %v396 = vlaneseq
    %v397 = vshrl.u32 %v396, 7
    %v398 = vsub.s32 0, %v397
    %v399 = vrot.slane %v41, %v398
    %v401 = vmul.f32 %v394, %v399
    %vm402 = vcmask 1041408
    %v403 = vsel %vm402, %v401, 0.0
    %404 = vadd.xlane.f32.xlu0 %v403
    %v405 = vpop.xlane.xlu0 %404
    %v406 = vstv %s42
    %v407 = vadd.f32 %v405, %v406
    %v409 = vlaneseq
    %v410 = vand.u32 %v409, 127
    %v411 = vlaneseq
    %v412 = vshrl.u32 %v411, 7
    %v413 = vsub.s32 %v410, %v412
    %v414 = vrot.slane %v407, %v413
    %vm416 = vcmask 8192
    %417 = vst.msk [vmem:[%s6] sm:$0x1] %vm416, %v414
    %s418 = scalar_lea.vmem %s0, 2
    %v419 = vld [vmem:[%s418] sm:$0x3]
    %421 = vset.pattern.permute.xlu0 0
    %422 = vperm.xlu0 %421, %v419
    %v423 = vpop.permute.xlu0 %422
    %v425 = vmul.f32 %v423, %v53
    %v426 = vmul.f32 %v423, %v57
    %v427 = vmul.f32 %v423, %v61
    %v428 = vmul.f32 %v423, %v65
    %v429 = vadd.f32 %v425, %v78
    %v430 = vadd.f32 %v426, %v82
    %v431 = vadd.f32 %v427, %v86
    %v432 = vadd.f32 %v428, %v90
    %v433 = vpack.c.bf16 %v394, %v394
    %v434 = vld [vmem:[#allocation3] sm:$0xff]
    %v435 = vld [vmem:[#allocation3 + $0x8] sm:$0xff]
    %v436 = vld [vmem:[#allocation3 + $0x10] sm:$0xff]
    %v437 = vld [vmem:[#allocation3 + $0x18] sm:$0xff]
    %v438 = vld [vmem:[#allocation3 + $0x20] sm:$0xff]
    %v439 = vld [vmem:[#allocation3 + $0x28] sm:$0xff]
    %v440 = vld [vmem:[#allocation3 + $0x30] sm:$0xff]
    %v441 = vld [vmem:[#allocation3 + $0x38] sm:$0xff]
    %v442 = vld [vmem:[#allocation3 + $0x40] sm:$0xff]
    %v443 = vld [vmem:[#allocation3 + $0x48] sm:$0xff]
    %v444 = vld [vmem:[#allocation3 + $0x50] sm:$0xff]
    %v445 = vld [vmem:[#allocation3 + $0x58] sm:$0xff]
    %v446 = vld [vmem:[#allocation3 + $0x60] sm:$0xff]
    %v447 = vld [vmem:[#allocation3 + $0x68] sm:$0xff]
    %v448 = vld [vmem:[#allocation3 + $0x70] sm:$0xff]
    %v449 = vld [vmem:[#allocation3 + $0x78] sm:$0xff]
    %v450 = vld [vmem:[#allocation3 + $0x80] sm:$0xff]
    %v451 = vld [vmem:[#allocation3 + $0x88] sm:$0xff]
    %v452 = vld [vmem:[#allocation3 + $0x90] sm:$0xff]
    %v453 = vld [vmem:[#allocation3 + $0x98] sm:$0xff]
    %v454 = vld [vmem:[#allocation3 + $0xa0] sm:$0xff]
    %v455 = vld [vmem:[#allocation3 + $0xa8] sm:$0xff]
    %v456 = vld [vmem:[#allocation3 + $0xb0] sm:$0xff]
    %v457 = vld [vmem:[#allocation3 + $0xb8] sm:$0xff]
    %v458 = vld [vmem:[#allocation3 + $0xc0] sm:$0xff]
    %v459 = vld [vmem:[#allocation3 + $0xc8] sm:$0xff]
    %v460 = vld [vmem:[#allocation3 + $0xd0] sm:$0xff]
    %v461 = vld [vmem:[#allocation3 + $0xd8] sm:$0xff]
    %v462 = vld [vmem:[#allocation3 + $0xe0] sm:$0xff]
    %v463 = vld [vmem:[#allocation3 + $0xe8] sm:$0xff]
    %v464 = vld [vmem:[#allocation3 + $0xf0] sm:$0xff]
    %v465 = vld [vmem:[#allocation3 + $0xf8] sm:$0xff]
    %v498 = vunpack.c.l.b16 %v434
    %v499 = vunpack.c.h.b16 %v434
    %v500 = vunpack.c.l.b16 %v435
    %v501 = vunpack.c.h.b16 %v435
    %v502 = vunpack.c.l.b16 %v436
    %v503 = vunpack.c.h.b16 %v436
    %v504 = vunpack.c.l.b16 %v437
    %v505 = vunpack.c.h.b16 %v437
    %v506 = vunpack.c.l.b16 %v438
    %v507 = vunpack.c.h.b16 %v438
    %v508 = vunpack.c.l.b16 %v439
    %v509 = vunpack.c.h.b16 %v439
    %v510 = vunpack.c.l.b16 %v440
    %v511 = vunpack.c.h.b16 %v440
    %v512 = vunpack.c.l.b16 %v441
    %v513 = vunpack.c.h.b16 %v441
    %v514 = vunpack.c.l.b16 %v442
    %v515 = vunpack.c.h.b16 %v442
    %v516 = vunpack.c.l.b16 %v443
    %v517 = vunpack.c.h.b16 %v443
    %v518 = vunpack.c.l.b16 %v444
    %v519 = vunpack.c.h.b16 %v444
    %v520 = vunpack.c.l.b16 %v445
    %v521 = vunpack.c.h.b16 %v445
    %v522 = vunpack.c.l.b16 %v446
    %v523 = vunpack.c.h.b16 %v446
    %v524 = vunpack.c.l.b16 %v447
    %v525 = vunpack.c.h.b16 %v447
    %v526 = vunpack.c.l.b16 %v448
    %v527 = vunpack.c.h.b16 %v448
    %v528 = vunpack.c.l.b16 %v449
    %v529 = vunpack.c.h.b16 %v449
    %v530 = vunpack.c.l.b16 %v450
    %v531 = vunpack.c.h.b16 %v450
    %v532 = vunpack.c.l.b16 %v451
    %v533 = vunpack.c.h.b16 %v451
    %v534 = vunpack.c.l.b16 %v452
    %v535 = vunpack.c.h.b16 %v452
    %v536 = vunpack.c.l.b16 %v453
    %v537 = vunpack.c.h.b16 %v453
    %v538 = vunpack.c.l.b16 %v454
    %v539 = vunpack.c.h.b16 %v454
    %v540 = vunpack.c.l.b16 %v455
    %v541 = vunpack.c.h.b16 %v455
    %v542 = vunpack.c.l.b16 %v456
    %v543 = vunpack.c.h.b16 %v456
    %v544 = vunpack.c.l.b16 %v457
    %v545 = vunpack.c.h.b16 %v457
    %v546 = vunpack.c.l.b16 %v458
    %v547 = vunpack.c.h.b16 %v458
    %v548 = vunpack.c.l.b16 %v459
    %v549 = vunpack.c.h.b16 %v459
    %v550 = vunpack.c.l.b16 %v460
    %v551 = vunpack.c.h.b16 %v460
    %v552 = vunpack.c.l.b16 %v461
    %v553 = vunpack.c.h.b16 %v461
    %v554 = vunpack.c.l.b16 %v462
    %v555 = vunpack.c.h.b16 %v462
    %v556 = vunpack.c.l.b16 %v463
    %v557 = vunpack.c.h.b16 %v463
    %v558 = vunpack.c.l.b16 %v464
    %v559 = vunpack.c.h.b16 %v464
    %v560 = vunpack.c.l.b16 %v465
    %v561 = vunpack.c.h.b16 %v465
    %v562 = vpack.c.b16 %v502, %v498
    %v563 = vpack.c.b16 %v503, %v499
    %v564 = vpack.c.b16 %v504, %v500
    %v565 = vpack.c.b16 %v505, %v501
    %v566 = vpack.c.b16 %v510, %v506
    %v567 = vpack.c.b16 %v511, %v507
    %v568 = vpack.c.b16 %v512, %v508
    %v569 = vpack.c.b16 %v513, %v509
    %v570 = vpack.c.b16 %v518, %v514
    %v571 = vpack.c.b16 %v519, %v515
    %v572 = vpack.c.b16 %v520, %v516
    %v573 = vpack.c.b16 %v521, %v517
    %v574 = vpack.c.b16 %v526, %v522
    %v575 = vpack.c.b16 %v527, %v523
    %v576 = vpack.c.b16 %v528, %v524
    %v577 = vpack.c.b16 %v529, %v525
    %v578 = vpack.c.b16 %v534, %v530
    %v579 = vpack.c.b16 %v535, %v531
    %v580 = vpack.c.b16 %v536, %v532
    %v581 = vpack.c.b16 %v537, %v533
    %v582 = vpack.c.b16 %v542, %v538
    %v583 = vpack.c.b16 %v543, %v539
    %v584 = vpack.c.b16 %v544, %v540
    %v585 = vpack.c.b16 %v545, %v541
    %v586 = vpack.c.b16 %v550, %v546
    %v587 = vpack.c.b16 %v551, %v547
    %v588 = vpack.c.b16 %v552, %v548
    %v589 = vpack.c.b16 %v553, %v549
    %v590 = vpack.c.b16 %v558, %v554
    %v591 = vpack.c.b16 %v559, %v555
    %v592 = vpack.c.b16 %v560, %v556
    %v593 = vpack.c.b16 %v561, %v557
    %626 = vmatprep.subr.bf16.mxu0 %v591
    %627 = vmatpush1.bf16.msra.mxu0 %v590
    %628 = vmatprep.subr.bf16.mxu0 %v587
    %629 = vmatpush1.bf16.msra.mxu0 %v586
    %630 = vmatprep.subr.bf16.mxu0 %v583
    %631 = vmatpush1.bf16.msra.mxu0 %v582
    %632 = vmatprep.subr.bf16.mxu0 %v579
    %633 = vmatpush1.bf16.msra.mxu0 %v578
    %634 = vmatprep.subr.bf16.mxu0 %v575
    %635 = vmatpush1.bf16.msra.mxu0 %v574
    %636 = vmatprep.subr.bf16.mxu0 %v571
    %637 = vmatpush1.bf16.msra.mxu0 %v570
    %638 = vmatprep.subr.bf16.mxu0 %v567
    %639 = vmatpush1.bf16.msra.mxu0 %v566
    %640 = vmatprep.subr.bf16.mxu0 %v563
    %641 = vmatpush1.bf16.msra.mxu0 %v562
    %642 = vmatprep.subr.bf16.mxu0 0
    %643 = vmatpush2.bf16.msra.mxu0 0
    %644 = vmatprep.subr.bf16.mxu0 0
    %645 = vmatpush2.bf16.msra.mxu0 0
    %646 = vmatprep.subr.bf16.mxu0 0
    %647 = vmatpush2.bf16.msra.mxu0 0
    %648 = vmatprep.subr.bf16.mxu0 0
    %649 = vmatpush2.bf16.msra.mxu0 0
    %650 = vmatprep.subr.bf16.mxu0 0
    %651 = vmatpush2.bf16.msra.mxu0 0
    %652 = vmatprep.subr.bf16.mxu0 0
    %653 = vmatpush2.bf16.msra.mxu0 0
    %654 = vmatprep.subr.bf16.mxu0 0
    %655 = vmatpush2.bf16.msra.mxu0 0
    %656 = vmatprep.subr.bf16.mxu0 0
    %657 = vmatpush2.bf16.msra.mxu0 0
    %658 = vmatprep.mubr.bf16.mxu0 0
    %659 = vmatmul.mubr.bf16.gmra.mxu0 %v433
    %v660 = vpop.f32.mrf.mxu0
    %v661 = vadd.f32 0.0, %v660
    %v662 = vpop.f32.mrf.mxu0
    %v663 = vadd.f32 0.0, %v662
    %v664 = vpop.f32.mrf.mxu0
    %v665 = vpop.f32.mrf.mxu0
    %666 = vdwg.mxu0
    %667 = vmatprep.subr.bf16.mxu0 %v593
    %668 = vmatpush1.bf16.msra.mxu0 %v592
    %669 = vmatprep.subr.bf16.mxu0 %v589
    %670 = vmatpush1.bf16.msra.mxu0 %v588
    %671 = vmatprep.subr.bf16.mxu0 %v585
    %672 = vmatpush1.bf16.msra.mxu0 %v584
    %673 = vmatprep.subr.bf16.mxu0 %v581
    %674 = vmatpush1.bf16.msra.mxu0 %v580
    %675 = vmatprep.subr.bf16.mxu0 %v577
    %676 = vmatpush1.bf16.msra.mxu0 %v576
    %677 = vmatprep.subr.bf16.mxu0 %v573
    %678 = vmatpush1.bf16.msra.mxu0 %v572
    %679 = vmatprep.subr.bf16.mxu0 %v569
    %680 = vmatpush1.bf16.msra.mxu0 %v568
    %681 = vmatprep.subr.bf16.mxu0 %v565
    %682 = vmatpush1.bf16.msra.mxu0 %v564
    %683 = vmatprep.subr.bf16.mxu0 0
    %684 = vmatpush2.bf16.msra.mxu0 0
    %685 = vmatprep.subr.bf16.mxu0 0
    %686 = vmatpush2.bf16.msra.mxu0 0
    %687 = vmatprep.subr.bf16.mxu0 0
    %688 = vmatpush2.bf16.msra.mxu0 0
    %689 = vmatprep.subr.bf16.mxu0 0
    %690 = vmatpush2.bf16.msra.mxu0 0
    %691 = vmatprep.subr.bf16.mxu0 0
    %692 = vmatpush2.bf16.msra.mxu0 0
    %693 = vmatprep.subr.bf16.mxu0 0
    %694 = vmatpush2.bf16.msra.mxu0 0
    %695 = vmatprep.subr.bf16.mxu0 0
    %696 = vmatpush2.bf16.msra.mxu0 0
    %697 = vmatprep.subr.bf16.mxu0 0
    %698 = vmatpush2.bf16.msra.mxu0 0
    %699 = vmatprep.mubr.bf16.mxu0 0
    %700 = vmatmul.mubr.bf16.gmra.mxu0 %v433
    %v701 = vpop.f32.mrf.mxu0
    %v702 = vadd.f32 0.0, %v701
    %v703 = vpop.f32.mrf.mxu0
    %v704 = vadd.f32 0.0, %v703
    %v705 = vpop.f32.mrf.mxu0
    %v706 = vpop.f32.mrf.mxu0
    %707 = vdwg.mxu0
    %v708 = vadd.f32 %v429, %v661
    %v709 = vadd.f32 %v430, %v663
    %v710 = vadd.f32 %v431, %v702
    %v711 = vadd.f32 %v432, %v704
    %v712 = vmul.f32 %v708, 0.5
    %v713 = vtanh.pop %v712
    %v714 = vmul.f32 %v713, 0.5
    %v715 = vadd.f32 %v714, 0.5
    %v716 = vmul.f32 %v709, 0.5
    %v717 = vtanh.pop %v716
    %v718 = vmul.f32 %v717, 0.5
    %v719 = vadd.f32 %v718, 0.5
    %v720 = vtanh.pop %v710
    %v721 = vmul.f32 %v711, 0.5
    %v722 = vtanh.pop %v721
    %v723 = vmul.f32 %v722, 0.5
    %v724 = vadd.f32 %v723, 0.5
    %v725 = vmul.f32 %v719, %v392
    %v726 = vmul.f32 %v715, %v720
    %v727 = vadd.f32 %v725, %v726
    %v728 = vtanh.pop %v727
    %v729 = vmul.f32 %v724, %v728
    %v730 = vmul.f32 %v729, %v399
    %v731 = vsel %vm402, %v730, 0.0
    %732 = vadd.xlane.f32.xlu0 %v731
    %v733 = vpop.xlane.xlu0 %732
    %v734 = vadd.f32 %v733, %v406
    %v736 = vlaneseq
    %v737 = vshrl.u32 %v736, 7
    %v738 = vsub.s32 %v410, %v737
    %v739 = vrot.slane %v734, %v738
    %741 = vst.msk [vmem:[%s6 + $0x1] sm:$0x1] %vm416, %v739
    %s742 = scalar_lea.vmem %s0, 4
    %v743 = vld [vmem:[%s742] sm:$0x3]
    %745 = vset.pattern.permute.xlu0 0
    %746 = vperm.xlu0 %745, %v743
    %v747 = vpop.permute.xlu0 %746
    %v749 = vmul.f32 %v747, %v53
    %v750 = vmul.f32 %v747, %v57
    %v751 = vmul.f32 %v747, %v61
    %v752 = vmul.f32 %v747, %v65
    %v753 = vadd.f32 %v749, %v78
    %v754 = vadd.f32 %v750, %v82
    %v755 = vadd.f32 %v751, %v86
    %v756 = vadd.f32 %v752, %v90
    %v757 = vpack.c.bf16 %v729, %v729
    %v758 = vld [vmem:[#allocation3] sm:$0xff]
    %v759 = vld [vmem:[#allocation3 + $0x8] sm:$0xff]
    %v760 = vld [vmem:[#allocation3 + $0x10] sm:$0xff]
    %v761 = vld [vmem:[#allocation3 + $0x18] sm:$0xff]
    %v762 = vld [vmem:[#allocation3 + $0x20] sm:$0xff]
    %v763 = vld [vmem:[#allocation3 + $0x28] sm:$0xff]
    %v764 = vld [vmem:[#allocation3 + $0x30] sm:$0xff]
    %v765 = vld [vmem:[#allocation3 + $0x38] sm:$0xff]
    %v766 = vld [vmem:[#allocation3 + $0x40] sm:$0xff]
    %v767 = vld [vmem:[#allocation3 + $0x48] sm:$0xff]
    %v768 = vld [vmem:[#allocation3 + $0x50] sm:$0xff]
    %v769 = vld [vmem:[#allocation3 + $0x58] sm:$0xff]
    %v770 = vld [vmem:[#allocation3 + $0x60] sm:$0xff]
    %v771 = vld [vmem:[#allocation3 + $0x68] sm:$0xff]
    %v772 = vld [vmem:[#allocation3 + $0x70] sm:$0xff]
    %v773 = vld [vmem:[#allocation3 + $0x78] sm:$0xff]
    %v774 = vld [vmem:[#allocation3 + $0x80] sm:$0xff]
    %v775 = vld [vmem:[#allocation3 + $0x88] sm:$0xff]
    %v776 = vld [vmem:[#allocation3 + $0x90] sm:$0xff]
    %v777 = vld [vmem:[#allocation3 + $0x98] sm:$0xff]
    %v778 = vld [vmem:[#allocation3 + $0xa0] sm:$0xff]
    %v779 = vld [vmem:[#allocation3 + $0xa8] sm:$0xff]
    %v780 = vld [vmem:[#allocation3 + $0xb0] sm:$0xff]
    %v781 = vld [vmem:[#allocation3 + $0xb8] sm:$0xff]
    %v782 = vld [vmem:[#allocation3 + $0xc0] sm:$0xff]
    %v783 = vld [vmem:[#allocation3 + $0xc8] sm:$0xff]
    %v784 = vld [vmem:[#allocation3 + $0xd0] sm:$0xff]
    %v785 = vld [vmem:[#allocation3 + $0xd8] sm:$0xff]
    %v786 = vld [vmem:[#allocation3 + $0xe0] sm:$0xff]
    %v787 = vld [vmem:[#allocation3 + $0xe8] sm:$0xff]
    %v788 = vld [vmem:[#allocation3 + $0xf0] sm:$0xff]
    %v789 = vld [vmem:[#allocation3 + $0xf8] sm:$0xff]
    %v822 = vunpack.c.l.b16 %v758
    %v823 = vunpack.c.h.b16 %v758
    %v824 = vunpack.c.l.b16 %v759
    %v825 = vunpack.c.h.b16 %v759
    %v826 = vunpack.c.l.b16 %v760
    %v827 = vunpack.c.h.b16 %v760
    %v828 = vunpack.c.l.b16 %v761
    %v829 = vunpack.c.h.b16 %v761
    %v830 = vunpack.c.l.b16 %v762
    %v831 = vunpack.c.h.b16 %v762
    %v832 = vunpack.c.l.b16 %v763
    %v833 = vunpack.c.h.b16 %v763
    %v834 = vunpack.c.l.b16 %v764
    %v835 = vunpack.c.h.b16 %v764
    %v836 = vunpack.c.l.b16 %v765
    %v837 = vunpack.c.h.b16 %v765
    %v838 = vunpack.c.l.b16 %v766
    %v839 = vunpack.c.h.b16 %v766
    %v840 = vunpack.c.l.b16 %v767
    %v841 = vunpack.c.h.b16 %v767
    %v842 = vunpack.c.l.b16 %v768
    %v843 = vunpack.c.h.b16 %v768
    %v844 = vunpack.c.l.b16 %v769
    %v845 = vunpack.c.h.b16 %v769
    %v846 = vunpack.c.l.b16 %v770
    %v847 = vunpack.c.h.b16 %v770
    %v848 = vunpack.c.l.b16 %v771
    %v849 = vunpack.c.h.b16 %v771
    %v850 = vunpack.c.l.b16 %v772
    %v851 = vunpack.c.h.b16 %v772
    %v852 = vunpack.c.l.b16 %v773
    %v853 = vunpack.c.h.b16 %v773
    %v854 = vunpack.c.l.b16 %v774
    %v855 = vunpack.c.h.b16 %v774
    %v856 = vunpack.c.l.b16 %v775
    %v857 = vunpack.c.h.b16 %v775
    %v858 = vunpack.c.l.b16 %v776
    %v859 = vunpack.c.h.b16 %v776
    %v860 = vunpack.c.l.b16 %v777
    %v861 = vunpack.c.h.b16 %v777
    %v862 = vunpack.c.l.b16 %v778
    %v863 = vunpack.c.h.b16 %v778
    %v864 = vunpack.c.l.b16 %v779
    %v865 = vunpack.c.h.b16 %v779
    %v866 = vunpack.c.l.b16 %v780
    %v867 = vunpack.c.h.b16 %v780
    %v868 = vunpack.c.l.b16 %v781
    %v869 = vunpack.c.h.b16 %v781
    %v870 = vunpack.c.l.b16 %v782
    %v871 = vunpack.c.h.b16 %v782
    %v872 = vunpack.c.l.b16 %v783
    %v873 = vunpack.c.h.b16 %v783
    %v874 = vunpack.c.l.b16 %v784
    %v875 = vunpack.c.h.b16 %v784
    %v876 = vunpack.c.l.b16 %v785
    %v877 = vunpack.c.h.b16 %v785
    %v878 = vunpack.c.l.b16 %v786
    %v879 = vunpack.c.h.b16 %v786
    %v880 = vunpack.c.l.b16 %v787
    %v881 = vunpack.c.h.b16 %v787
    %v882 = vunpack.c.l.b16 %v788
    %v883 = vunpack.c.h.b16 %v788
    %v884 = vunpack.c.l.b16 %v789
    %v885 = vunpack.c.h.b16 %v789
    %v886 = vpack.c.b16 %v826, %v822
    %v887 = vpack.c.b16 %v827, %v823
    %v888 = vpack.c.b16 %v828, %v824
    %v889 = vpack.c.b16 %v829, %v825
    %v890 = vpack.c.b16 %v834, %v830
    %v891 = vpack.c.b16 %v835, %v831
    %v892 = vpack.c.b16 %v836, %v832
    %v893 = vpack.c.b16 %v837, %v833
    %v894 = vpack.c.b16 %v842, %v838
    %v895 = vpack.c.b16 %v843, %v839
    %v896 = vpack.c.b16 %v844, %v840
    %v897 = vpack.c.b16 %v845, %v841
    %v898 = vpack.c.b16 %v850, %v846
    %v899 = vpack.c.b16 %v851, %v847
    %v900 = vpack.c.b16 %v852, %v848
    %v901 = vpack.c.b16 %v853, %v849
    %v902 = vpack.c.b16 %v858, %v854
    %v903 = vpack.c.b16 %v859, %v855
    %v904 = vpack.c.b16 %v860, %v856
    %v905 = vpack.c.b16 %v861, %v857
    %v906 = vpack.c.b16 %v866, %v862
    %v907 = vpack.c.b16 %v867, %v863
    %v908 = vpack.c.b16 %v868, %v864
    %v909 = vpack.c.b16 %v869, %v865
    %v910 = vpack.c.b16 %v874, %v870
    %v911 = vpack.c.b16 %v875, %v871
    %v912 = vpack.c.b16 %v876, %v872
    %v913 = vpack.c.b16 %v877, %v873
    %v914 = vpack.c.b16 %v882, %v878
    %v915 = vpack.c.b16 %v883, %v879
    %v916 = vpack.c.b16 %v884, %v880
    %v917 = vpack.c.b16 %v885, %v881
    %950 = vmatprep.subr.bf16.mxu0 %v915
    %951 = vmatpush1.bf16.msra.mxu0 %v914
    %952 = vmatprep.subr.bf16.mxu0 %v911
    %953 = vmatpush1.bf16.msra.mxu0 %v910
    %954 = vmatprep.subr.bf16.mxu0 %v907
    %955 = vmatpush1.bf16.msra.mxu0 %v906
    %956 = vmatprep.subr.bf16.mxu0 %v903
    %957 = vmatpush1.bf16.msra.mxu0 %v902
    %958 = vmatprep.subr.bf16.mxu0 %v899
    %959 = vmatpush1.bf16.msra.mxu0 %v898
    %960 = vmatprep.subr.bf16.mxu0 %v895
    %961 = vmatpush1.bf16.msra.mxu0 %v894
    %962 = vmatprep.subr.bf16.mxu0 %v891
    %963 = vmatpush1.bf16.msra.mxu0 %v890
    %964 = vmatprep.subr.bf16.mxu0 %v887
    %965 = vmatpush1.bf16.msra.mxu0 %v886
    %966 = vmatprep.subr.bf16.mxu0 0
    %967 = vmatpush2.bf16.msra.mxu0 0
    %968 = vmatprep.subr.bf16.mxu0 0
    %969 = vmatpush2.bf16.msra.mxu0 0
    %970 = vmatprep.subr.bf16.mxu0 0
    %971 = vmatpush2.bf16.msra.mxu0 0
    %972 = vmatprep.subr.bf16.mxu0 0
    %973 = vmatpush2.bf16.msra.mxu0 0
    %974 = vmatprep.subr.bf16.mxu0 0
    %975 = vmatpush2.bf16.msra.mxu0 0
    %976 = vmatprep.subr.bf16.mxu0 0
    %977 = vmatpush2.bf16.msra.mxu0 0
    %978 = vmatprep.subr.bf16.mxu0 0
    %979 = vmatpush2.bf16.msra.mxu0 0
    %980 = vmatprep.subr.bf16.mxu0 0
    %981 = vmatpush2.bf16.msra.mxu0 0
    %982 = vmatprep.mubr.bf16.mxu0 0
    %983 = vmatmul.mubr.bf16.gmra.mxu0 %v757
    %v984 = vpop.f32.mrf.mxu0
    %v985 = vadd.f32 0.0, %v984
    %v986 = vpop.f32.mrf.mxu0
    %v987 = vadd.f32 0.0, %v986
    %v988 = vpop.f32.mrf.mxu0
    %v989 = vpop.f32.mrf.mxu0
    %990 = vdwg.mxu0
    %991 = vmatprep.subr.bf16.mxu0 %v917
    %992 = vmatpush1.bf16.msra.mxu0 %v916
    %993 = vmatprep.subr.bf16.mxu0 %v913
    %994 = vmatpush1.bf16.msra.mxu0 %v912
    %995 = vmatprep.subr.bf16.mxu0 %v909
    %996 = vmatpush1.bf16.msra.mxu0 %v908
    %997 = vmatprep.subr.bf16.mxu0 %v905
    %998 = vmatpush1.bf16.msra.mxu0 %v904
    %999 = vmatprep.subr.bf16.mxu0 %v901
    %1000 = vmatpush1.bf16.msra.mxu0 %v900
    %1001 = vmatprep.subr.bf16.mxu0 %v897
    %1002 = vmatpush1.bf16.msra.mxu0 %v896
    %1003 = vmatprep.subr.bf16.mxu0 %v893
    %1004 = vmatpush1.bf16.msra.mxu0 %v892
    %1005 = vmatprep.subr.bf16.mxu0 %v889
    %1006 = vmatpush1.bf16.msra.mxu0 %v888
    %1007 = vmatprep.subr.bf16.mxu0 0
    %1008 = vmatpush2.bf16.msra.mxu0 0
    %1009 = vmatprep.subr.bf16.mxu0 0
    %1010 = vmatpush2.bf16.msra.mxu0 0
    %1011 = vmatprep.subr.bf16.mxu0 0
    %1012 = vmatpush2.bf16.msra.mxu0 0
    %1013 = vmatprep.subr.bf16.mxu0 0
    %1014 = vmatpush2.bf16.msra.mxu0 0
    %1015 = vmatprep.subr.bf16.mxu0 0
    %1016 = vmatpush2.bf16.msra.mxu0 0
    %1017 = vmatprep.subr.bf16.mxu0 0
    %1018 = vmatpush2.bf16.msra.mxu0 0
    %1019 = vmatprep.subr.bf16.mxu0 0
    %1020 = vmatpush2.bf16.msra.mxu0 0
    %1021 = vmatprep.subr.bf16.mxu0 0
    %1022 = vmatpush2.bf16.msra.mxu0 0
    %1023 = vmatprep.mubr.bf16.mxu0 0
    %1024 = vmatmul.mubr.bf16.gmra.mxu0 %v757
    %v1025 = vpop.f32.mrf.mxu0
    %v1026 = vadd.f32 0.0, %v1025
    %v1027 = vpop.f32.mrf.mxu0
    %v1028 = vadd.f32 0.0, %v1027
    %v1029 = vpop.f32.mrf.mxu0
    %v1030 = vpop.f32.mrf.mxu0
    %1031 = vdwg.mxu0
    %v1032 = vadd.f32 %v753, %v985
    %v1033 = vadd.f32 %v754, %v987
    %v1034 = vadd.f32 %v755, %v1026
    %v1035 = vadd.f32 %v756, %v1028
    %v1036 = vmul.f32 %v1032, 0.5
    %v1037 = vtanh.pop %v1036
    %v1038 = vmul.f32 %v1037, 0.5
    %v1039 = vadd.f32 %v1038, 0.5
    %v1040 = vmul.f32 %v1033, 0.5
    %v1041 = vtanh.pop %v1040
    %v1042 = vmul.f32 %v1041, 0.5
    %v1043 = vadd.f32 %v1042, 0.5
    %v1044 = vtanh.pop %v1034
    %v1045 = vmul.f32 %v1035, 0.5
    %v1046 = vtanh.pop %v1045
    %v1047 = vmul.f32 %v1046, 0.5
    %v1048 = vadd.f32 %v1047, 0.5
    %v1049 = vmul.f32 %v1043, %v727
    %v1050 = vmul.f32 %v1039, %v1044
    %v1051 = vadd.f32 %v1049, %v1050
    %v1052 = vtanh.pop %v1051
    %v1053 = vmul.f32 %v1048, %v1052
    %v1054 = vmul.f32 %v1053, %v399
    %v1055 = vsel %vm402, %v1054, 0.0
    %1056 = vadd.xlane.f32.xlu0 %v1055
    %v1057 = vpop.xlane.xlu0 %1056
    %v1058 = vadd.f32 %v1057, %v406
    %v1060 = vlaneseq
    %v1061 = vshrl.u32 %v1060, 7
    %v1062 = vsub.s32 %v410, %v1061
    %v1063 = vrot.slane %v1058, %v1062
    %1065 = vst.msk [vmem:[%s6 + $0x2] sm:$0x1] %vm416, %v1063
    %s1066 = scalar_lea.vmem %s0, 6
    %v1067 = vld [vmem:[%s1066] sm:$0x3]
    %1069 = vset.pattern.permute.xlu0 0
    %1070 = vperm.xlu0 %1069, %v1067
    %v1071 = vpop.permute.xlu0 %1070
    %v1073 = vmul.f32 %v1071, %v53
    %v1074 = vmul.f32 %v1071, %v57
    %v1075 = vmul.f32 %v1071, %v61
    %v1076 = vmul.f32 %v1071, %v65
    %v1077 = vadd.f32 %v1073, %v78
    %v1078 = vadd.f32 %v1074, %v82
    %v1079 = vadd.f32 %v1075, %v86
    %v1080 = vadd.f32 %v1076, %v90
    %v1081 = vpack.c.bf16 %v1053, %v1053
    %v1082 = vld [vmem:[#allocation3] sm:$0xff]
    %v1083 = vld [vmem:[#allocation3 + $0x8] sm:$0xff]
    %v1084 = vld [vmem:[#allocation3 + $0x10] sm:$0xff]
    %v1085 = vld [vmem:[#allocation3 + $0x18] sm:$0xff]
    %v1086 = vld [vmem:[#allocation3 + $0x20] sm:$0xff]
    %v1087 = vld [vmem:[#allocation3 + $0x28] sm:$0xff]
    %v1088 = vld [vmem:[#allocation3 + $0x30] sm:$0xff]
    %v1089 = vld [vmem:[#allocation3 + $0x38] sm:$0xff]
    %v1090 = vld [vmem:[#allocation3 + $0x40] sm:$0xff]
    %v1091 = vld [vmem:[#allocation3 + $0x48] sm:$0xff]
    %v1092 = vld [vmem:[#allocation3 + $0x50] sm:$0xff]
    %v1093 = vld [vmem:[#allocation3 + $0x58] sm:$0xff]
    %v1094 = vld [vmem:[#allocation3 + $0x60] sm:$0xff]
    %v1095 = vld [vmem:[#allocation3 + $0x68] sm:$0xff]
    %v1096 = vld [vmem:[#allocation3 + $0x70] sm:$0xff]
    %v1097 = vld [vmem:[#allocation3 + $0x78] sm:$0xff]
    %v1098 = vld [vmem:[#allocation3 + $0x80] sm:$0xff]
    %v1099 = vld [vmem:[#allocation3 + $0x88] sm:$0xff]
    %v1100 = vld [vmem:[#allocation3 + $0x90] sm:$0xff]
    %v1101 = vld [vmem:[#allocation3 + $0x98] sm:$0xff]
    %v1102 = vld [vmem:[#allocation3 + $0xa0] sm:$0xff]
    %v1103 = vld [vmem:[#allocation3 + $0xa8] sm:$0xff]
    %v1104 = vld [vmem:[#allocation3 + $0xb0] sm:$0xff]
    %v1105 = vld [vmem:[#allocation3 + $0xb8] sm:$0xff]
    %v1106 = vld [vmem:[#allocation3 + $0xc0] sm:$0xff]
    %v1107 = vld [vmem:[#allocation3 + $0xc8] sm:$0xff]
    %v1108 = vld [vmem:[#allocation3 + $0xd0] sm:$0xff]
    %v1109 = vld [vmem:[#allocation3 + $0xd8] sm:$0xff]
    %v1110 = vld [vmem:[#allocation3 + $0xe0] sm:$0xff]
    %v1111 = vld [vmem:[#allocation3 + $0xe8] sm:$0xff]
    %v1112 = vld [vmem:[#allocation3 + $0xf0] sm:$0xff]
    %v1113 = vld [vmem:[#allocation3 + $0xf8] sm:$0xff]
    %v1146 = vunpack.c.l.b16 %v1082
    %v1147 = vunpack.c.h.b16 %v1082
    %v1148 = vunpack.c.l.b16 %v1083
    %v1149 = vunpack.c.h.b16 %v1083
    %v1150 = vunpack.c.l.b16 %v1084
    %v1151 = vunpack.c.h.b16 %v1084
    %v1152 = vunpack.c.l.b16 %v1085
    %v1153 = vunpack.c.h.b16 %v1085
    %v1154 = vunpack.c.l.b16 %v1086
    %v1155 = vunpack.c.h.b16 %v1086
    %v1156 = vunpack.c.l.b16 %v1087
    %v1157 = vunpack.c.h.b16 %v1087
    %v1158 = vunpack.c.l.b16 %v1088
    %v1159 = vunpack.c.h.b16 %v1088
    %v1160 = vunpack.c.l.b16 %v1089
    %v1161 = vunpack.c.h.b16 %v1089
    %v1162 = vunpack.c.l.b16 %v1090
    %v1163 = vunpack.c.h.b16 %v1090
    %v1164 = vunpack.c.l.b16 %v1091
    %v1165 = vunpack.c.h.b16 %v1091
    %v1166 = vunpack.c.l.b16 %v1092
    %v1167 = vunpack.c.h.b16 %v1092
    %v1168 = vunpack.c.l.b16 %v1093
    %v1169 = vunpack.c.h.b16 %v1093
    %v1170 = vunpack.c.l.b16 %v1094
    %v1171 = vunpack.c.h.b16 %v1094
    %v1172 = vunpack.c.l.b16 %v1095
    %v1173 = vunpack.c.h.b16 %v1095
    %v1174 = vunpack.c.l.b16 %v1096
    %v1175 = vunpack.c.h.b16 %v1096
    %v1176 = vunpack.c.l.b16 %v1097
    %v1177 = vunpack.c.h.b16 %v1097
    %v1178 = vunpack.c.l.b16 %v1098
    %v1179 = vunpack.c.h.b16 %v1098
    %v1180 = vunpack.c.l.b16 %v1099
    %v1181 = vunpack.c.h.b16 %v1099
    %v1182 = vunpack.c.l.b16 %v1100
    %v1183 = vunpack.c.h.b16 %v1100
    %v1184 = vunpack.c.l.b16 %v1101
    %v1185 = vunpack.c.h.b16 %v1101
    %v1186 = vunpack.c.l.b16 %v1102
    %v1187 = vunpack.c.h.b16 %v1102
    %v1188 = vunpack.c.l.b16 %v1103
    %v1189 = vunpack.c.h.b16 %v1103
    %v1190 = vunpack.c.l.b16 %v1104
    %v1191 = vunpack.c.h.b16 %v1104
    %v1192 = vunpack.c.l.b16 %v1105
    %v1193 = vunpack.c.h.b16 %v1105
    %v1194 = vunpack.c.l.b16 %v1106
    %v1195 = vunpack.c.h.b16 %v1106
    %v1196 = vunpack.c.l.b16 %v1107
    %v1197 = vunpack.c.h.b16 %v1107
    %v1198 = vunpack.c.l.b16 %v1108
    %v1199 = vunpack.c.h.b16 %v1108
    %v1200 = vunpack.c.l.b16 %v1109
    %v1201 = vunpack.c.h.b16 %v1109
    %v1202 = vunpack.c.l.b16 %v1110
    %v1203 = vunpack.c.h.b16 %v1110
    %v1204 = vunpack.c.l.b16 %v1111
    %v1205 = vunpack.c.h.b16 %v1111
    %v1206 = vunpack.c.l.b16 %v1112
    %v1207 = vunpack.c.h.b16 %v1112
    %v1208 = vunpack.c.l.b16 %v1113
    %v1209 = vunpack.c.h.b16 %v1113
    %v1210 = vpack.c.b16 %v1150, %v1146
    %v1211 = vpack.c.b16 %v1151, %v1147
    %v1212 = vpack.c.b16 %v1152, %v1148
    %v1213 = vpack.c.b16 %v1153, %v1149
    %v1214 = vpack.c.b16 %v1158, %v1154
    %v1215 = vpack.c.b16 %v1159, %v1155
    %v1216 = vpack.c.b16 %v1160, %v1156
    %v1217 = vpack.c.b16 %v1161, %v1157
    %v1218 = vpack.c.b16 %v1166, %v1162
    %v1219 = vpack.c.b16 %v1167, %v1163
    %v1220 = vpack.c.b16 %v1168, %v1164
    %v1221 = vpack.c.b16 %v1169, %v1165
    %v1222 = vpack.c.b16 %v1174, %v1170
    %v1223 = vpack.c.b16 %v1175, %v1171
    %v1224 = vpack.c.b16 %v1176, %v1172
    %v1225 = vpack.c.b16 %v1177, %v1173
    %v1226 = vpack.c.b16 %v1182, %v1178
    %v1227 = vpack.c.b16 %v1183, %v1179
    %v1228 = vpack.c.b16 %v1184, %v1180
    %v1229 = vpack.c.b16 %v1185, %v1181
    %v1230 = vpack.c.b16 %v1190, %v1186
    %v1231 = vpack.c.b16 %v1191, %v1187
    %v1232 = vpack.c.b16 %v1192, %v1188
    %v1233 = vpack.c.b16 %v1193, %v1189
    %v1234 = vpack.c.b16 %v1198, %v1194
    %v1235 = vpack.c.b16 %v1199, %v1195
    %v1236 = vpack.c.b16 %v1200, %v1196
    %v1237 = vpack.c.b16 %v1201, %v1197
    %v1238 = vpack.c.b16 %v1206, %v1202
    %v1239 = vpack.c.b16 %v1207, %v1203
    %v1240 = vpack.c.b16 %v1208, %v1204
    %v1241 = vpack.c.b16 %v1209, %v1205
    %1274 = vmatprep.subr.bf16.mxu0 %v1239
    %1275 = vmatpush1.bf16.msra.mxu0 %v1238
    %1276 = vmatprep.subr.bf16.mxu0 %v1235
    %1277 = vmatpush1.bf16.msra.mxu0 %v1234
    %1278 = vmatprep.subr.bf16.mxu0 %v1231
    %1279 = vmatpush1.bf16.msra.mxu0 %v1230
    %1280 = vmatprep.subr.bf16.mxu0 %v1227
    %1281 = vmatpush1.bf16.msra.mxu0 %v1226
    %1282 = vmatprep.subr.bf16.mxu0 %v1223
    %1283 = vmatpush1.bf16.msra.mxu0 %v1222
    %1284 = vmatprep.subr.bf16.mxu0 %v1219
    %1285 = vmatpush1.bf16.msra.mxu0 %v1218
    %1286 = vmatprep.subr.bf16.mxu0 %v1215
    %1287 = vmatpush1.bf16.msra.mxu0 %v1214
    %1288 = vmatprep.subr.bf16.mxu0 %v1211
    %1289 = vmatpush1.bf16.msra.mxu0 %v1210
    %1290 = vmatprep.subr.bf16.mxu0 0
    %1291 = vmatpush2.bf16.msra.mxu0 0
    %1292 = vmatprep.subr.bf16.mxu0 0
    %1293 = vmatpush2.bf16.msra.mxu0 0
    %1294 = vmatprep.subr.bf16.mxu0 0
    %1295 = vmatpush2.bf16.msra.mxu0 0
    %1296 = vmatprep.subr.bf16.mxu0 0
    %1297 = vmatpush2.bf16.msra.mxu0 0
    %1298 = vmatprep.subr.bf16.mxu0 0
    %1299 = vmatpush2.bf16.msra.mxu0 0
    %1300 = vmatprep.subr.bf16.mxu0 0
    %1301 = vmatpush2.bf16.msra.mxu0 0
    %1302 = vmatprep.subr.bf16.mxu0 0
    %1303 = vmatpush2.bf16.msra.mxu0 0
    %1304 = vmatprep.subr.bf16.mxu0 0
    %1305 = vmatpush2.bf16.msra.mxu0 0
    %1306 = vmatprep.mubr.bf16.mxu0 0
    %1307 = vmatmul.mubr.bf16.gmra.mxu0 %v1081
    %v1308 = vpop.f32.mrf.mxu0
    %v1309 = vadd.f32 0.0, %v1308
    %v1310 = vpop.f32.mrf.mxu0
    %v1311 = vadd.f32 0.0, %v1310
    %v1312 = vpop.f32.mrf.mxu0
    %v1313 = vpop.f32.mrf.mxu0
    %1314 = vdwg.mxu0
    %1315 = vmatprep.subr.bf16.mxu0 %v1241
    %1316 = vmatpush1.bf16.msra.mxu0 %v1240
    %1317 = vmatprep.subr.bf16.mxu0 %v1237
    %1318 = vmatpush1.bf16.msra.mxu0 %v1236
    %1319 = vmatprep.subr.bf16.mxu0 %v1233
    %1320 = vmatpush1.bf16.msra.mxu0 %v1232
    %1321 = vmatprep.subr.bf16.mxu0 %v1229
    %1322 = vmatpush1.bf16.msra.mxu0 %v1228
    %1323 = vmatprep.subr.bf16.mxu0 %v1225
    %1324 = vmatpush1.bf16.msra.mxu0 %v1224
    %1325 = vmatprep.subr.bf16.mxu0 %v1221
    %1326 = vmatpush1.bf16.msra.mxu0 %v1220
    %1327 = vmatprep.subr.bf16.mxu0 %v1217
    %1328 = vmatpush1.bf16.msra.mxu0 %v1216
    %1329 = vmatprep.subr.bf16.mxu0 %v1213
    %1330 = vmatpush1.bf16.msra.mxu0 %v1212
    %1331 = vmatprep.subr.bf16.mxu0 0
    %1332 = vmatpush2.bf16.msra.mxu0 0
    %1333 = vmatprep.subr.bf16.mxu0 0
    %1334 = vmatpush2.bf16.msra.mxu0 0
    %1335 = vmatprep.subr.bf16.mxu0 0
    %1336 = vmatpush2.bf16.msra.mxu0 0
    %1337 = vmatprep.subr.bf16.mxu0 0
    %1338 = vmatpush2.bf16.msra.mxu0 0
    %1339 = vmatprep.subr.bf16.mxu0 0
    %1340 = vmatpush2.bf16.msra.mxu0 0
    %1341 = vmatprep.subr.bf16.mxu0 0
    %1342 = vmatpush2.bf16.msra.mxu0 0
    %1343 = vmatprep.subr.bf16.mxu0 0
    %1344 = vmatpush2.bf16.msra.mxu0 0
    %1345 = vmatprep.subr.bf16.mxu0 0
    %1346 = vmatpush2.bf16.msra.mxu0 0
    %1347 = vmatprep.mubr.bf16.mxu0 0
    %1348 = vmatmul.mubr.bf16.gmra.mxu0 %v1081
    %v1349 = vpop.f32.mrf.mxu0
    %v1350 = vadd.f32 0.0, %v1349
    %v1351 = vpop.f32.mrf.mxu0
    %v1352 = vadd.f32 0.0, %v1351
    %v1353 = vpop.f32.mrf.mxu0
    %v1354 = vpop.f32.mrf.mxu0
    %1355 = vdwg.mxu0
    %v1356 = vadd.f32 %v1077, %v1309
    %v1357 = vadd.f32 %v1078, %v1311
    %v1358 = vadd.f32 %v1079, %v1350
    %v1359 = vadd.f32 %v1080, %v1352
    %v1360 = vmul.f32 %v1356, 0.5
    %v1361 = vtanh.pop %v1360
    %v1362 = vmul.f32 %v1361, 0.5
    %v1363 = vadd.f32 %v1362, 0.5
    %v1364 = vmul.f32 %v1357, 0.5
    %v1365 = vtanh.pop %v1364
    %v1366 = vmul.f32 %v1365, 0.5
    %v1367 = vadd.f32 %v1366, 0.5
    %v1368 = vtanh.pop %v1358
    %v1369 = vmul.f32 %v1359, 0.5
    %v1370 = vtanh.pop %v1369
    %v1371 = vmul.f32 %v1370, 0.5
    %v1372 = vadd.f32 %v1371, 0.5
    %v1373 = vmul.f32 %v1367, %v1051
    %v1374 = vmul.f32 %v1363, %v1368
    %v1375 = vadd.f32 %v1373, %v1374
    %v1376 = vtanh.pop %v1375
    %v1377 = vmul.f32 %v1372, %v1376
    %v1378 = vmul.f32 %v1377, %v399
    %v1379 = vsel %vm402, %v1378, 0.0
    %1380 = vadd.xlane.f32.xlu0 %v1379
    %v1381 = vpop.xlane.xlu0 %1380
    %v1382 = vadd.f32 %v1381, %v406
    %v1384 = vlaneseq
    %v1385 = vshrl.u32 %v1384, 7
    %v1386 = vsub.s32 %v410, %v1385
    %v1387 = vrot.slane %v1382, %v1386
    %1389 = vst.msk [vmem:[%s6 + $0x3] sm:$0x1] %vm416, %v1387
    %s1390 = scalar_lea.vmem %s0, 8
    %v1391 = vld [vmem:[%s1390] sm:$0x3]
    %1393 = vset.pattern.permute.xlu0 0
    %1394 = vperm.xlu0 %1393, %v1391
    %v1395 = vpop.permute.xlu0 %1394
    %v1397 = vmul.f32 %v1395, %v53
    %v1398 = vmul.f32 %v1395, %v57
    %v1399 = vmul.f32 %v1395, %v61
    %v1400 = vmul.f32 %v1395, %v65
    %v1401 = vadd.f32 %v1397, %v78
    %v1402 = vadd.f32 %v1398, %v82
    %v1403 = vadd.f32 %v1399, %v86
    %v1404 = vadd.f32 %v1400, %v90
    %v1405 = vpack.c.bf16 %v1377, %v1377
    %v1406 = vld [vmem:[#allocation3] sm:$0xff]
    %v1407 = vld [vmem:[#allocation3 + $0x8] sm:$0xff]
    %v1408 = vld [vmem:[#allocation3 + $0x10] sm:$0xff]
    %v1409 = vld [vmem:[#allocation3 + $0x18] sm:$0xff]
    %v1410 = vld [vmem:[#allocation3 + $0x20] sm:$0xff]
    %v1411 = vld [vmem:[#allocation3 + $0x28] sm:$0xff]
    %v1412 = vld [vmem:[#allocation3 + $0x30] sm:$0xff]
    %v1413 = vld [vmem:[#allocation3 + $0x38] sm:$0xff]
    %v1414 = vld [vmem:[#allocation3 + $0x40] sm:$0xff]
    %v1415 = vld [vmem:[#allocation3 + $0x48] sm:$0xff]
    %v1416 = vld [vmem:[#allocation3 + $0x50] sm:$0xff]
    %v1417 = vld [vmem:[#allocation3 + $0x58] sm:$0xff]
    %v1418 = vld [vmem:[#allocation3 + $0x60] sm:$0xff]
    %v1419 = vld [vmem:[#allocation3 + $0x68] sm:$0xff]
    %v1420 = vld [vmem:[#allocation3 + $0x70] sm:$0xff]
    %v1421 = vld [vmem:[#allocation3 + $0x78] sm:$0xff]
    %v1422 = vld [vmem:[#allocation3 + $0x80] sm:$0xff]
    %v1423 = vld [vmem:[#allocation3 + $0x88] sm:$0xff]
    %v1424 = vld [vmem:[#allocation3 + $0x90] sm:$0xff]
    %v1425 = vld [vmem:[#allocation3 + $0x98] sm:$0xff]
    %v1426 = vld [vmem:[#allocation3 + $0xa0] sm:$0xff]
    %v1427 = vld [vmem:[#allocation3 + $0xa8] sm:$0xff]
    %v1428 = vld [vmem:[#allocation3 + $0xb0] sm:$0xff]
    %v1429 = vld [vmem:[#allocation3 + $0xb8] sm:$0xff]
    %v1430 = vld [vmem:[#allocation3 + $0xc0] sm:$0xff]
    %v1431 = vld [vmem:[#allocation3 + $0xc8] sm:$0xff]
    %v1432 = vld [vmem:[#allocation3 + $0xd0] sm:$0xff]
    %v1433 = vld [vmem:[#allocation3 + $0xd8] sm:$0xff]
    %v1434 = vld [vmem:[#allocation3 + $0xe0] sm:$0xff]
    %v1435 = vld [vmem:[#allocation3 + $0xe8] sm:$0xff]
    %v1436 = vld [vmem:[#allocation3 + $0xf0] sm:$0xff]
    %v1437 = vld [vmem:[#allocation3 + $0xf8] sm:$0xff]
    %v1470 = vunpack.c.l.b16 %v1406
    %v1471 = vunpack.c.h.b16 %v1406
    %v1472 = vunpack.c.l.b16 %v1407
    %v1473 = vunpack.c.h.b16 %v1407
    %v1474 = vunpack.c.l.b16 %v1408
    %v1475 = vunpack.c.h.b16 %v1408
    %v1476 = vunpack.c.l.b16 %v1409
    %v1477 = vunpack.c.h.b16 %v1409
    %v1478 = vunpack.c.l.b16 %v1410
    %v1479 = vunpack.c.h.b16 %v1410
    %v1480 = vunpack.c.l.b16 %v1411
    %v1481 = vunpack.c.h.b16 %v1411
    %v1482 = vunpack.c.l.b16 %v1412
    %v1483 = vunpack.c.h.b16 %v1412
    %v1484 = vunpack.c.l.b16 %v1413
    %v1485 = vunpack.c.h.b16 %v1413
    %v1486 = vunpack.c.l.b16 %v1414
    %v1487 = vunpack.c.h.b16 %v1414
    %v1488 = vunpack.c.l.b16 %v1415
    %v1489 = vunpack.c.h.b16 %v1415
    %v1490 = vunpack.c.l.b16 %v1416
    %v1491 = vunpack.c.h.b16 %v1416
    %v1492 = vunpack.c.l.b16 %v1417
    %v1493 = vunpack.c.h.b16 %v1417
    %v1494 = vunpack.c.l.b16 %v1418
    %v1495 = vunpack.c.h.b16 %v1418
    %v1496 = vunpack.c.l.b16 %v1419
    %v1497 = vunpack.c.h.b16 %v1419
    %v1498 = vunpack.c.l.b16 %v1420
    %v1499 = vunpack.c.h.b16 %v1420
    %v1500 = vunpack.c.l.b16 %v1421
    %v1501 = vunpack.c.h.b16 %v1421
    %v1502 = vunpack.c.l.b16 %v1422
    %v1503 = vunpack.c.h.b16 %v1422
    %v1504 = vunpack.c.l.b16 %v1423
    %v1505 = vunpack.c.h.b16 %v1423
    %v1506 = vunpack.c.l.b16 %v1424
    %v1507 = vunpack.c.h.b16 %v1424
    %v1508 = vunpack.c.l.b16 %v1425
    %v1509 = vunpack.c.h.b16 %v1425
    %v1510 = vunpack.c.l.b16 %v1426
    %v1511 = vunpack.c.h.b16 %v1426
    %v1512 = vunpack.c.l.b16 %v1427
    %v1513 = vunpack.c.h.b16 %v1427
    %v1514 = vunpack.c.l.b16 %v1428
    %v1515 = vunpack.c.h.b16 %v1428
    %v1516 = vunpack.c.l.b16 %v1429
    %v1517 = vunpack.c.h.b16 %v1429
    %v1518 = vunpack.c.l.b16 %v1430
    %v1519 = vunpack.c.h.b16 %v1430
    %v1520 = vunpack.c.l.b16 %v1431
    %v1521 = vunpack.c.h.b16 %v1431
    %v1522 = vunpack.c.l.b16 %v1432
    %v1523 = vunpack.c.h.b16 %v1432
    %v1524 = vunpack.c.l.b16 %v1433
    %v1525 = vunpack.c.h.b16 %v1433
    %v1526 = vunpack.c.l.b16 %v1434
    %v1527 = vunpack.c.h.b16 %v1434
    %v1528 = vunpack.c.l.b16 %v1435
    %v1529 = vunpack.c.h.b16 %v1435
    %v1530 = vunpack.c.l.b16 %v1436
    %v1531 = vunpack.c.h.b16 %v1436
    %v1532 = vunpack.c.l.b16 %v1437
    %v1533 = vunpack.c.h.b16 %v1437
    %v1534 = vpack.c.b16 %v1474, %v1470
    %v1535 = vpack.c.b16 %v1475, %v1471
    %v1536 = vpack.c.b16 %v1476, %v1472
    %v1537 = vpack.c.b16 %v1477, %v1473
    %v1538 = vpack.c.b16 %v1482, %v1478
    %v1539 = vpack.c.b16 %v1483, %v1479
    %v1540 = vpack.c.b16 %v1484, %v1480
    %v1541 = vpack.c.b16 %v1485, %v1481
    %v1542 = vpack.c.b16 %v1490, %v1486
    %v1543 = vpack.c.b16 %v1491, %v1487
    %v1544 = vpack.c.b16 %v1492, %v1488
    %v1545 = vpack.c.b16 %v1493, %v1489
    %v1546 = vpack.c.b16 %v1498, %v1494
    %v1547 = vpack.c.b16 %v1499, %v1495
    %v1548 = vpack.c.b16 %v1500, %v1496
    %v1549 = vpack.c.b16 %v1501, %v1497
    %v1550 = vpack.c.b16 %v1506, %v1502
    %v1551 = vpack.c.b16 %v1507, %v1503
    %v1552 = vpack.c.b16 %v1508, %v1504
    %v1553 = vpack.c.b16 %v1509, %v1505
    %v1554 = vpack.c.b16 %v1514, %v1510
    %v1555 = vpack.c.b16 %v1515, %v1511
    %v1556 = vpack.c.b16 %v1516, %v1512
    %v1557 = vpack.c.b16 %v1517, %v1513
    %v1558 = vpack.c.b16 %v1522, %v1518
    %v1559 = vpack.c.b16 %v1523, %v1519
    %v1560 = vpack.c.b16 %v1524, %v1520
    %v1561 = vpack.c.b16 %v1525, %v1521
    %v1562 = vpack.c.b16 %v1530, %v1526
    %v1563 = vpack.c.b16 %v1531, %v1527
    %v1564 = vpack.c.b16 %v1532, %v1528
    %v1565 = vpack.c.b16 %v1533, %v1529
    %1598 = vmatprep.subr.bf16.mxu0 %v1563
    %1599 = vmatpush1.bf16.msra.mxu0 %v1562
    %1600 = vmatprep.subr.bf16.mxu0 %v1559
    %1601 = vmatpush1.bf16.msra.mxu0 %v1558
    %1602 = vmatprep.subr.bf16.mxu0 %v1555
    %1603 = vmatpush1.bf16.msra.mxu0 %v1554
    %1604 = vmatprep.subr.bf16.mxu0 %v1551
    %1605 = vmatpush1.bf16.msra.mxu0 %v1550
    %1606 = vmatprep.subr.bf16.mxu0 %v1547
    %1607 = vmatpush1.bf16.msra.mxu0 %v1546
    %1608 = vmatprep.subr.bf16.mxu0 %v1543
    %1609 = vmatpush1.bf16.msra.mxu0 %v1542
    %1610 = vmatprep.subr.bf16.mxu0 %v1539
    %1611 = vmatpush1.bf16.msra.mxu0 %v1538
    %1612 = vmatprep.subr.bf16.mxu0 %v1535
    %1613 = vmatpush1.bf16.msra.mxu0 %v1534
    %1614 = vmatprep.subr.bf16.mxu0 0
    %1615 = vmatpush2.bf16.msra.mxu0 0
    %1616 = vmatprep.subr.bf16.mxu0 0
    %1617 = vmatpush2.bf16.msra.mxu0 0
    %1618 = vmatprep.subr.bf16.mxu0 0
    %1619 = vmatpush2.bf16.msra.mxu0 0
    %1620 = vmatprep.subr.bf16.mxu0 0
    %1621 = vmatpush2.bf16.msra.mxu0 0
    %1622 = vmatprep.subr.bf16.mxu0 0
    %1623 = vmatpush2.bf16.msra.mxu0 0
    %1624 = vmatprep.subr.bf16.mxu0 0
    %1625 = vmatpush2.bf16.msra.mxu0 0
    %1626 = vmatprep.subr.bf16.mxu0 0
    %1627 = vmatpush2.bf16.msra.mxu0 0
    %1628 = vmatprep.subr.bf16.mxu0 0
    %1629 = vmatpush2.bf16.msra.mxu0 0
    %1630 = vmatprep.mubr.bf16.mxu0 0
    %1631 = vmatmul.mubr.bf16.gmra.mxu0 %v1405
    %v1632 = vpop.f32.mrf.mxu0
    %v1633 = vadd.f32 0.0, %v1632
    %v1634 = vpop.f32.mrf.mxu0
    %v1635 = vadd.f32 0.0, %v1634
    %v1636 = vpop.f32.mrf.mxu0
    %v1637 = vpop.f32.mrf.mxu0
    %1638 = vdwg.mxu0
    %1639 = vmatprep.subr.bf16.mxu0 %v1565
    %1640 = vmatpush1.bf16.msra.mxu0 %v1564
    %1641 = vmatprep.subr.bf16.mxu0 %v1561
    %1642 = vmatpush1.bf16.msra.mxu0 %v1560
    %1643 = vmatprep.subr.bf16.mxu0 %v1557
    %1644 = vmatpush1.bf16.msra.mxu0 %v1556
    %1645 = vmatprep.subr.bf16.mxu0 %v1553
    %1646 = vmatpush1.bf16.msra.mxu0 %v1552
    %1647 = vmatprep.subr.bf16.mxu0 %v1549
    %1648 = vmatpush1.bf16.msra.mxu0 %v1548
    %1649 = vmatprep.subr.bf16.mxu0 %v1545
    %1650 = vmatpush1.bf16.msra.mxu0 %v1544
    %1651 = vmatprep.subr.bf16.mxu0 %v1541
    %1652 = vmatpush1.bf16.msra.mxu0 %v1540
    %1653 = vmatprep.subr.bf16.mxu0 %v1537
    %1654 = vmatpush1.bf16.msra.mxu0 %v1536
    %1655 = vmatprep.subr.bf16.mxu0 0
    %1656 = vmatpush2.bf16.msra.mxu0 0
    %1657 = vmatprep.subr.bf16.mxu0 0
    %1658 = vmatpush2.bf16.msra.mxu0 0
    %1659 = vmatprep.subr.bf16.mxu0 0
    %1660 = vmatpush2.bf16.msra.mxu0 0
    %1661 = vmatprep.subr.bf16.mxu0 0
    %1662 = vmatpush2.bf16.msra.mxu0 0
    %1663 = vmatprep.subr.bf16.mxu0 0
    %1664 = vmatpush2.bf16.msra.mxu0 0
    %1665 = vmatprep.subr.bf16.mxu0 0
    %1666 = vmatpush2.bf16.msra.mxu0 0
    %1667 = vmatprep.subr.bf16.mxu0 0
    %1668 = vmatpush2.bf16.msra.mxu0 0
    %1669 = vmatprep.subr.bf16.mxu0 0
    %1670 = vmatpush2.bf16.msra.mxu0 0
    %1671 = vmatprep.mubr.bf16.mxu0 0
    %1672 = vmatmul.mubr.bf16.gmra.mxu0 %v1405
    %v1673 = vpop.f32.mrf.mxu0
    %v1674 = vadd.f32 0.0, %v1673
    %v1675 = vpop.f32.mrf.mxu0
    %v1676 = vadd.f32 0.0, %v1675
    %v1677 = vpop.f32.mrf.mxu0
    %v1678 = vpop.f32.mrf.mxu0
    %1679 = vdwg.mxu0
    %v1680 = vadd.f32 %v1401, %v1633
    %v1681 = vadd.f32 %v1402, %v1635
    %v1682 = vadd.f32 %v1403, %v1674
    %v1683 = vadd.f32 %v1404, %v1676
    %v1684 = vmul.f32 %v1680, 0.5
    %v1685 = vtanh.pop %v1684
    %v1686 = vmul.f32 %v1685, 0.5
    %v1687 = vadd.f32 %v1686, 0.5
    %v1688 = vmul.f32 %v1681, 0.5
    %v1689 = vtanh.pop %v1688
    %v1690 = vmul.f32 %v1689, 0.5
    %v1691 = vadd.f32 %v1690, 0.5
    %v1692 = vtanh.pop %v1682
    %v1693 = vmul.f32 %v1683, 0.5
    %v1694 = vtanh.pop %v1693
    %v1695 = vmul.f32 %v1694, 0.5
    %v1696 = vadd.f32 %v1695, 0.5
    %v1697 = vmul.f32 %v1691, %v1375
    %v1698 = vmul.f32 %v1687, %v1692
    %v1699 = vadd.f32 %v1697, %v1698
    %v1700 = vtanh.pop %v1699
    %v1701 = vmul.f32 %v1696, %v1700
    %v1702 = vmul.f32 %v1701, %v399
    %v1703 = vsel %vm402, %v1702, 0.0
    %1704 = vadd.xlane.f32.xlu0 %v1703
    %v1705 = vpop.xlane.xlu0 %1704
    %v1706 = vadd.f32 %v1705, %v406
    %v1708 = vlaneseq
    %v1709 = vshrl.u32 %v1708, 7
    %v1710 = vsub.s32 %v410, %v1709
    %v1711 = vrot.slane %v1706, %v1710
    %1713 = vst.msk [vmem:[%s6 + $0x4] sm:$0x1] %vm416, %v1711
    %s1714 = scalar_lea.vmem %s0, 10
    %v1715 = vld [vmem:[%s1714] sm:$0x3]
    %1717 = vset.pattern.permute.xlu0 0
    %1718 = vperm.xlu0 %1717, %v1715
    %v1719 = vpop.permute.xlu0 %1718
    %v1721 = vmul.f32 %v1719, %v53
    %v1722 = vmul.f32 %v1719, %v57
    %v1723 = vmul.f32 %v1719, %v61
    %v1724 = vmul.f32 %v1719, %v65
    %v1725 = vadd.f32 %v1721, %v78
    %v1726 = vadd.f32 %v1722, %v82
    %v1727 = vadd.f32 %v1723, %v86
    %v1728 = vadd.f32 %v1724, %v90
    %v1729 = vpack.c.bf16 %v1701, %v1701
    %v1730 = vld [vmem:[#allocation3] sm:$0xff]
    %v1731 = vld [vmem:[#allocation3 + $0x8] sm:$0xff]
    %v1732 = vld [vmem:[#allocation3 + $0x10] sm:$0xff]
    %v1733 = vld [vmem:[#allocation3 + $0x18] sm:$0xff]
    %v1734 = vld [vmem:[#allocation3 + $0x20] sm:$0xff]
    %v1735 = vld [vmem:[#allocation3 + $0x28] sm:$0xff]
    %v1736 = vld [vmem:[#allocation3 + $0x30] sm:$0xff]
    %v1737 = vld [vmem:[#allocation3 + $0x38] sm:$0xff]
    %v1738 = vld [vmem:[#allocation3 + $0x40] sm:$0xff]
    %v1739 = vld [vmem:[#allocation3 + $0x48] sm:$0xff]
    %v1740 = vld [vmem:[#allocation3 + $0x50] sm:$0xff]
    %v1741 = vld [vmem:[#allocation3 + $0x58] sm:$0xff]
    %v1742 = vld [vmem:[#allocation3 + $0x60] sm:$0xff]
    %v1743 = vld [vmem:[#allocation3 + $0x68] sm:$0xff]
    %v1744 = vld [vmem:[#allocation3 + $0x70] sm:$0xff]
    %v1745 = vld [vmem:[#allocation3 + $0x78] sm:$0xff]
    %v1746 = vld [vmem:[#allocation3 + $0x80] sm:$0xff]
    %v1747 = vld [vmem:[#allocation3 + $0x88] sm:$0xff]
    %v1748 = vld [vmem:[#allocation3 + $0x90] sm:$0xff]
    %v1749 = vld [vmem:[#allocation3 + $0x98] sm:$0xff]
    %v1750 = vld [vmem:[#allocation3 + $0xa0] sm:$0xff]
    %v1751 = vld [vmem:[#allocation3 + $0xa8] sm:$0xff]
    %v1752 = vld [vmem:[#allocation3 + $0xb0] sm:$0xff]
    %v1753 = vld [vmem:[#allocation3 + $0xb8] sm:$0xff]
    %v1754 = vld [vmem:[#allocation3 + $0xc0] sm:$0xff]
    %v1755 = vld [vmem:[#allocation3 + $0xc8] sm:$0xff]
    %v1756 = vld [vmem:[#allocation3 + $0xd0] sm:$0xff]
    %v1757 = vld [vmem:[#allocation3 + $0xd8] sm:$0xff]
    %v1758 = vld [vmem:[#allocation3 + $0xe0] sm:$0xff]
    %v1759 = vld [vmem:[#allocation3 + $0xe8] sm:$0xff]
    %v1760 = vld [vmem:[#allocation3 + $0xf0] sm:$0xff]
    %v1761 = vld [vmem:[#allocation3 + $0xf8] sm:$0xff]
    %v1794 = vunpack.c.l.b16 %v1730
    %v1795 = vunpack.c.h.b16 %v1730
    %v1796 = vunpack.c.l.b16 %v1731
    %v1797 = vunpack.c.h.b16 %v1731
    %v1798 = vunpack.c.l.b16 %v1732
    %v1799 = vunpack.c.h.b16 %v1732
    %v1800 = vunpack.c.l.b16 %v1733
    %v1801 = vunpack.c.h.b16 %v1733
    %v1802 = vunpack.c.l.b16 %v1734
    %v1803 = vunpack.c.h.b16 %v1734
    %v1804 = vunpack.c.l.b16 %v1735
    %v1805 = vunpack.c.h.b16 %v1735
    %v1806 = vunpack.c.l.b16 %v1736
    %v1807 = vunpack.c.h.b16 %v1736
    %v1808 = vunpack.c.l.b16 %v1737
    %v1809 = vunpack.c.h.b16 %v1737
    %v1810 = vunpack.c.l.b16 %v1738
    %v1811 = vunpack.c.h.b16 %v1738
    %v1812 = vunpack.c.l.b16 %v1739
    %v1813 = vunpack.c.h.b16 %v1739
    %v1814 = vunpack.c.l.b16 %v1740
    %v1815 = vunpack.c.h.b16 %v1740
    %v1816 = vunpack.c.l.b16 %v1741
    %v1817 = vunpack.c.h.b16 %v1741
    %v1818 = vunpack.c.l.b16 %v1742
    %v1819 = vunpack.c.h.b16 %v1742
    %v1820 = vunpack.c.l.b16 %v1743
    %v1821 = vunpack.c.h.b16 %v1743
    %v1822 = vunpack.c.l.b16 %v1744
    %v1823 = vunpack.c.h.b16 %v1744
    %v1824 = vunpack.c.l.b16 %v1745
    %v1825 = vunpack.c.h.b16 %v1745
    %v1826 = vunpack.c.l.b16 %v1746
    %v1827 = vunpack.c.h.b16 %v1746
    %v1828 = vunpack.c.l.b16 %v1747
    %v1829 = vunpack.c.h.b16 %v1747
    %v1830 = vunpack.c.l.b16 %v1748
    %v1831 = vunpack.c.h.b16 %v1748
    %v1832 = vunpack.c.l.b16 %v1749
    %v1833 = vunpack.c.h.b16 %v1749
    %v1834 = vunpack.c.l.b16 %v1750
    %v1835 = vunpack.c.h.b16 %v1750
    %v1836 = vunpack.c.l.b16 %v1751
    %v1837 = vunpack.c.h.b16 %v1751
    %v1838 = vunpack.c.l.b16 %v1752
    %v1839 = vunpack.c.h.b16 %v1752
    %v1840 = vunpack.c.l.b16 %v1753
    %v1841 = vunpack.c.h.b16 %v1753
    %v1842 = vunpack.c.l.b16 %v1754
    %v1843 = vunpack.c.h.b16 %v1754
    %v1844 = vunpack.c.l.b16 %v1755
    %v1845 = vunpack.c.h.b16 %v1755
    %v1846 = vunpack.c.l.b16 %v1756
    %v1847 = vunpack.c.h.b16 %v1756
    %v1848 = vunpack.c.l.b16 %v1757
    %v1849 = vunpack.c.h.b16 %v1757
    %v1850 = vunpack.c.l.b16 %v1758
    %v1851 = vunpack.c.h.b16 %v1758
    %v1852 = vunpack.c.l.b16 %v1759
    %v1853 = vunpack.c.h.b16 %v1759
    %v1854 = vunpack.c.l.b16 %v1760
    %v1855 = vunpack.c.h.b16 %v1760
    %v1856 = vunpack.c.l.b16 %v1761
    %v1857 = vunpack.c.h.b16 %v1761
    %v1858 = vpack.c.b16 %v1798, %v1794
    %v1859 = vpack.c.b16 %v1799, %v1795
    %v1860 = vpack.c.b16 %v1800, %v1796
    %v1861 = vpack.c.b16 %v1801, %v1797
    %v1862 = vpack.c.b16 %v1806, %v1802
    %v1863 = vpack.c.b16 %v1807, %v1803
    %v1864 = vpack.c.b16 %v1808, %v1804
    %v1865 = vpack.c.b16 %v1809, %v1805
    %v1866 = vpack.c.b16 %v1814, %v1810
    %v1867 = vpack.c.b16 %v1815, %v1811
    %v1868 = vpack.c.b16 %v1816, %v1812
    %v1869 = vpack.c.b16 %v1817, %v1813
    %v1870 = vpack.c.b16 %v1822, %v1818
    %v1871 = vpack.c.b16 %v1823, %v1819
    %v1872 = vpack.c.b16 %v1824, %v1820
    %v1873 = vpack.c.b16 %v1825, %v1821
    %v1874 = vpack.c.b16 %v1830, %v1826
    %v1875 = vpack.c.b16 %v1831, %v1827
    %v1876 = vpack.c.b16 %v1832, %v1828
    %v1877 = vpack.c.b16 %v1833, %v1829
    %v1878 = vpack.c.b16 %v1838, %v1834
    %v1879 = vpack.c.b16 %v1839, %v1835
    %v1880 = vpack.c.b16 %v1840, %v1836
    %v1881 = vpack.c.b16 %v1841, %v1837
    %v1882 = vpack.c.b16 %v1846, %v1842
    %v1883 = vpack.c.b16 %v1847, %v1843
    %v1884 = vpack.c.b16 %v1848, %v1844
    %v1885 = vpack.c.b16 %v1849, %v1845
    %v1886 = vpack.c.b16 %v1854, %v1850
    %v1887 = vpack.c.b16 %v1855, %v1851
    %v1888 = vpack.c.b16 %v1856, %v1852
    %v1889 = vpack.c.b16 %v1857, %v1853
    %1922 = vmatprep.subr.bf16.mxu0 %v1887
    %1923 = vmatpush1.bf16.msra.mxu0 %v1886
    %1924 = vmatprep.subr.bf16.mxu0 %v1883
    %1925 = vmatpush1.bf16.msra.mxu0 %v1882
    %1926 = vmatprep.subr.bf16.mxu0 %v1879
    %1927 = vmatpush1.bf16.msra.mxu0 %v1878
    %1928 = vmatprep.subr.bf16.mxu0 %v1875
    %1929 = vmatpush1.bf16.msra.mxu0 %v1874
    %1930 = vmatprep.subr.bf16.mxu0 %v1871
    %1931 = vmatpush1.bf16.msra.mxu0 %v1870
    %1932 = vmatprep.subr.bf16.mxu0 %v1867
    %1933 = vmatpush1.bf16.msra.mxu0 %v1866
    %1934 = vmatprep.subr.bf16.mxu0 %v1863
    %1935 = vmatpush1.bf16.msra.mxu0 %v1862
    %1936 = vmatprep.subr.bf16.mxu0 %v1859
    %1937 = vmatpush1.bf16.msra.mxu0 %v1858
    %1938 = vmatprep.subr.bf16.mxu0 0
    %1939 = vmatpush2.bf16.msra.mxu0 0
    %1940 = vmatprep.subr.bf16.mxu0 0
    %1941 = vmatpush2.bf16.msra.mxu0 0
    %1942 = vmatprep.subr.bf16.mxu0 0
    %1943 = vmatpush2.bf16.msra.mxu0 0
    %1944 = vmatprep.subr.bf16.mxu0 0
    %1945 = vmatpush2.bf16.msra.mxu0 0
    %1946 = vmatprep.subr.bf16.mxu0 0
    %1947 = vmatpush2.bf16.msra.mxu0 0
    %1948 = vmatprep.subr.bf16.mxu0 0
    %1949 = vmatpush2.bf16.msra.mxu0 0
    %1950 = vmatprep.subr.bf16.mxu0 0
    %1951 = vmatpush2.bf16.msra.mxu0 0
    %1952 = vmatprep.subr.bf16.mxu0 0
    %1953 = vmatpush2.bf16.msra.mxu0 0
    %1954 = vmatprep.mubr.bf16.mxu0 0
    %1955 = vmatmul.mubr.bf16.gmra.mxu0 %v1729
    %v1956 = vpop.f32.mrf.mxu0
    %v1957 = vadd.f32 0.0, %v1956
    %v1958 = vpop.f32.mrf.mxu0
    %v1959 = vadd.f32 0.0, %v1958
    %v1960 = vpop.f32.mrf.mxu0
    %v1961 = vpop.f32.mrf.mxu0
    %1962 = vdwg.mxu0
    %1963 = vmatprep.subr.bf16.mxu0 %v1889
    %1964 = vmatpush1.bf16.msra.mxu0 %v1888
    %1965 = vmatprep.subr.bf16.mxu0 %v1885
    %1966 = vmatpush1.bf16.msra.mxu0 %v1884
    %1967 = vmatprep.subr.bf16.mxu0 %v1881
    %1968 = vmatpush1.bf16.msra.mxu0 %v1880
    %1969 = vmatprep.subr.bf16.mxu0 %v1877
    %1970 = vmatpush1.bf16.msra.mxu0 %v1876
    %1971 = vmatprep.subr.bf16.mxu0 %v1873
    %1972 = vmatpush1.bf16.msra.mxu0 %v1872
    %1973 = vmatprep.subr.bf16.mxu0 %v1869
    %1974 = vmatpush1.bf16.msra.mxu0 %v1868
    %1975 = vmatprep.subr.bf16.mxu0 %v1865
    %1976 = vmatpush1.bf16.msra.mxu0 %v1864
    %1977 = vmatprep.subr.bf16.mxu0 %v1861
    %1978 = vmatpush1.bf16.msra.mxu0 %v1860
    %1979 = vmatprep.subr.bf16.mxu0 0
    %1980 = vmatpush2.bf16.msra.mxu0 0
    %1981 = vmatprep.subr.bf16.mxu0 0
    %1982 = vmatpush2.bf16.msra.mxu0 0
    %1983 = vmatprep.subr.bf16.mxu0 0
    %1984 = vmatpush2.bf16.msra.mxu0 0
    %1985 = vmatprep.subr.bf16.mxu0 0
    %1986 = vmatpush2.bf16.msra.mxu0 0
    %1987 = vmatprep.subr.bf16.mxu0 0
    %1988 = vmatpush2.bf16.msra.mxu0 0
    %1989 = vmatprep.subr.bf16.mxu0 0
    %1990 = vmatpush2.bf16.msra.mxu0 0
    %1991 = vmatprep.subr.bf16.mxu0 0
    %1992 = vmatpush2.bf16.msra.mxu0 0
    %1993 = vmatprep.subr.bf16.mxu0 0
    %1994 = vmatpush2.bf16.msra.mxu0 0
    %1995 = vmatprep.mubr.bf16.mxu0 0
    %1996 = vmatmul.mubr.bf16.gmra.mxu0 %v1729
    %v1997 = vpop.f32.mrf.mxu0
    %v1998 = vadd.f32 0.0, %v1997
    %v1999 = vpop.f32.mrf.mxu0
    %v2000 = vadd.f32 0.0, %v1999
    %v2001 = vpop.f32.mrf.mxu0
    %v2002 = vpop.f32.mrf.mxu0
    %2003 = vdwg.mxu0
    %v2004 = vadd.f32 %v1725, %v1957
    %v2005 = vadd.f32 %v1726, %v1959
    %v2006 = vadd.f32 %v1727, %v1998
    %v2007 = vadd.f32 %v1728, %v2000
    %v2008 = vmul.f32 %v2004, 0.5
    %v2009 = vtanh.pop %v2008
    %v2010 = vmul.f32 %v2009, 0.5
    %v2011 = vadd.f32 %v2010, 0.5
    %v2012 = vmul.f32 %v2005, 0.5
    %v2013 = vtanh.pop %v2012
    %v2014 = vmul.f32 %v2013, 0.5
    %v2015 = vadd.f32 %v2014, 0.5
    %v2016 = vtanh.pop %v2006
    %v2017 = vmul.f32 %v2007, 0.5
    %v2018 = vtanh.pop %v2017
    %v2019 = vmul.f32 %v2018, 0.5
    %v2020 = vadd.f32 %v2019, 0.5
    %v2021 = vmul.f32 %v2015, %v1699
    %v2022 = vmul.f32 %v2011, %v2016
    %v2023 = vadd.f32 %v2021, %v2022
    %v2024 = vtanh.pop %v2023
    %v2025 = vmul.f32 %v2020, %v2024
    %v2026 = vmul.f32 %v2025, %v399
    %v2027 = vsel %vm402, %v2026, 0.0
    %2028 = vadd.xlane.f32.xlu0 %v2027
    %v2029 = vpop.xlane.xlu0 %2028
    %v2030 = vadd.f32 %v2029, %v406
    %v2032 = vlaneseq
    %v2033 = vshrl.u32 %v2032, 7
    %v2034 = vsub.s32 %v410, %v2033
    %v2035 = vrot.slane %v2030, %v2034
    %2037 = vst.msk [vmem:[%s6 + $0x5] sm:$0x1] %vm416, %v2035
    %s2038 = scalar_lea.vmem %s0, 12
    %v2039 = vld [vmem:[%s2038] sm:$0x3]
    %2041 = vset.pattern.permute.xlu0 0
    %2042 = vperm.xlu0 %2041, %v2039
    %v2043 = vpop.permute.xlu0 %2042
    %v2045 = vmul.f32 %v2043, %v53
    %v2046 = vmul.f32 %v2043, %v57
    %v2047 = vmul.f32 %v2043, %v61
    %v2048 = vmul.f32 %v2043, %v65
    %v2049 = vadd.f32 %v2045, %v78
    %v2050 = vadd.f32 %v2046, %v82
    %v2051 = vadd.f32 %v2047, %v86
    %v2052 = vadd.f32 %v2048, %v90
    %v2053 = vpack.c.bf16 %v2025, %v2025
    %v2054 = vld [vmem:[#allocation3] sm:$0xff]
    %v2055 = vld [vmem:[#allocation3 + $0x8] sm:$0xff]
    %v2056 = vld [vmem:[#allocation3 + $0x10] sm:$0xff]
    %v2057 = vld [vmem:[#allocation3 + $0x18] sm:$0xff]
    %v2058 = vld [vmem:[#allocation3 + $0x20] sm:$0xff]
    %v2059 = vld [vmem:[#allocation3 + $0x28] sm:$0xff]
    %v2060 = vld [vmem:[#allocation3 + $0x30] sm:$0xff]
    %v2061 = vld [vmem:[#allocation3 + $0x38] sm:$0xff]
    %v2062 = vld [vmem:[#allocation3 + $0x40] sm:$0xff]
    %v2063 = vld [vmem:[#allocation3 + $0x48] sm:$0xff]
    %v2064 = vld [vmem:[#allocation3 + $0x50] sm:$0xff]
    %v2065 = vld [vmem:[#allocation3 + $0x58] sm:$0xff]
    %v2066 = vld [vmem:[#allocation3 + $0x60] sm:$0xff]
    %v2067 = vld [vmem:[#allocation3 + $0x68] sm:$0xff]
    %v2068 = vld [vmem:[#allocation3 + $0x70] sm:$0xff]
    %v2069 = vld [vmem:[#allocation3 + $0x78] sm:$0xff]
    %v2070 = vld [vmem:[#allocation3 + $0x80] sm:$0xff]
    %v2071 = vld [vmem:[#allocation3 + $0x88] sm:$0xff]
    %v2072 = vld [vmem:[#allocation3 + $0x90] sm:$0xff]
    %v2073 = vld [vmem:[#allocation3 + $0x98] sm:$0xff]
    %v2074 = vld [vmem:[#allocation3 + $0xa0] sm:$0xff]
    %v2075 = vld [vmem:[#allocation3 + $0xa8] sm:$0xff]
    %v2076 = vld [vmem:[#allocation3 + $0xb0] sm:$0xff]
    %v2077 = vld [vmem:[#allocation3 + $0xb8] sm:$0xff]
    %v2078 = vld [vmem:[#allocation3 + $0xc0] sm:$0xff]
    %v2079 = vld [vmem:[#allocation3 + $0xc8] sm:$0xff]
    %v2080 = vld [vmem:[#allocation3 + $0xd0] sm:$0xff]
    %v2081 = vld [vmem:[#allocation3 + $0xd8] sm:$0xff]
    %v2082 = vld [vmem:[#allocation3 + $0xe0] sm:$0xff]
    %v2083 = vld [vmem:[#allocation3 + $0xe8] sm:$0xff]
    %v2084 = vld [vmem:[#allocation3 + $0xf0] sm:$0xff]
    %v2085 = vld [vmem:[#allocation3 + $0xf8] sm:$0xff]
    %v2118 = vunpack.c.l.b16 %v2054
    %v2119 = vunpack.c.h.b16 %v2054
    %v2120 = vunpack.c.l.b16 %v2055
    %v2121 = vunpack.c.h.b16 %v2055
    %v2122 = vunpack.c.l.b16 %v2056
    %v2123 = vunpack.c.h.b16 %v2056
    %v2124 = vunpack.c.l.b16 %v2057
    %v2125 = vunpack.c.h.b16 %v2057
    %v2126 = vunpack.c.l.b16 %v2058
    %v2127 = vunpack.c.h.b16 %v2058
    %v2128 = vunpack.c.l.b16 %v2059
    %v2129 = vunpack.c.h.b16 %v2059
    %v2130 = vunpack.c.l.b16 %v2060
    %v2131 = vunpack.c.h.b16 %v2060
    %v2132 = vunpack.c.l.b16 %v2061
    %v2133 = vunpack.c.h.b16 %v2061
    %v2134 = vunpack.c.l.b16 %v2062
    %v2135 = vunpack.c.h.b16 %v2062
    %v2136 = vunpack.c.l.b16 %v2063
    %v2137 = vunpack.c.h.b16 %v2063
    %v2138 = vunpack.c.l.b16 %v2064
    %v2139 = vunpack.c.h.b16 %v2064
    %v2140 = vunpack.c.l.b16 %v2065
    %v2141 = vunpack.c.h.b16 %v2065
    %v2142 = vunpack.c.l.b16 %v2066
    %v2143 = vunpack.c.h.b16 %v2066
    %v2144 = vunpack.c.l.b16 %v2067
    %v2145 = vunpack.c.h.b16 %v2067
    %v2146 = vunpack.c.l.b16 %v2068
    %v2147 = vunpack.c.h.b16 %v2068
    %v2148 = vunpack.c.l.b16 %v2069
    %v2149 = vunpack.c.h.b16 %v2069
    %v2150 = vunpack.c.l.b16 %v2070
    %v2151 = vunpack.c.h.b16 %v2070
    %v2152 = vunpack.c.l.b16 %v2071
    %v2153 = vunpack.c.h.b16 %v2071
    %v2154 = vunpack.c.l.b16 %v2072
    %v2155 = vunpack.c.h.b16 %v2072
    %v2156 = vunpack.c.l.b16 %v2073
    %v2157 = vunpack.c.h.b16 %v2073
    %v2158 = vunpack.c.l.b16 %v2074
    %v2159 = vunpack.c.h.b16 %v2074
    %v2160 = vunpack.c.l.b16 %v2075
    %v2161 = vunpack.c.h.b16 %v2075
    %v2162 = vunpack.c.l.b16 %v2076
    %v2163 = vunpack.c.h.b16 %v2076
    %v2164 = vunpack.c.l.b16 %v2077
    %v2165 = vunpack.c.h.b16 %v2077
    %v2166 = vunpack.c.l.b16 %v2078
    %v2167 = vunpack.c.h.b16 %v2078
    %v2168 = vunpack.c.l.b16 %v2079
    %v2169 = vunpack.c.h.b16 %v2079
    %v2170 = vunpack.c.l.b16 %v2080
    %v2171 = vunpack.c.h.b16 %v2080
    %v2172 = vunpack.c.l.b16 %v2081
    %v2173 = vunpack.c.h.b16 %v2081
    %v2174 = vunpack.c.l.b16 %v2082
    %v2175 = vunpack.c.h.b16 %v2082
    %v2176 = vunpack.c.l.b16 %v2083
    %v2177 = vunpack.c.h.b16 %v2083
    %v2178 = vunpack.c.l.b16 %v2084
    %v2179 = vunpack.c.h.b16 %v2084
    %v2180 = vunpack.c.l.b16 %v2085
    %v2181 = vunpack.c.h.b16 %v2085
    %v2182 = vpack.c.b16 %v2122, %v2118
    %v2183 = vpack.c.b16 %v2123, %v2119
    %v2184 = vpack.c.b16 %v2124, %v2120
    %v2185 = vpack.c.b16 %v2125, %v2121
    %v2186 = vpack.c.b16 %v2130, %v2126
    %v2187 = vpack.c.b16 %v2131, %v2127
    %v2188 = vpack.c.b16 %v2132, %v2128
    %v2189 = vpack.c.b16 %v2133, %v2129
    %v2190 = vpack.c.b16 %v2138, %v2134
    %v2191 = vpack.c.b16 %v2139, %v2135
    %v2192 = vpack.c.b16 %v2140, %v2136
    %v2193 = vpack.c.b16 %v2141, %v2137
    %v2194 = vpack.c.b16 %v2146, %v2142
    %v2195 = vpack.c.b16 %v2147, %v2143
    %v2196 = vpack.c.b16 %v2148, %v2144
    %v2197 = vpack.c.b16 %v2149, %v2145
    %v2198 = vpack.c.b16 %v2154, %v2150
    %v2199 = vpack.c.b16 %v2155, %v2151
    %v2200 = vpack.c.b16 %v2156, %v2152
    %v2201 = vpack.c.b16 %v2157, %v2153
    %v2202 = vpack.c.b16 %v2162, %v2158
    %v2203 = vpack.c.b16 %v2163, %v2159
    %v2204 = vpack.c.b16 %v2164, %v2160
    %v2205 = vpack.c.b16 %v2165, %v2161
    %v2206 = vpack.c.b16 %v2170, %v2166
    %v2207 = vpack.c.b16 %v2171, %v2167
    %v2208 = vpack.c.b16 %v2172, %v2168
    %v2209 = vpack.c.b16 %v2173, %v2169
    %v2210 = vpack.c.b16 %v2178, %v2174
    %v2211 = vpack.c.b16 %v2179, %v2175
    %v2212 = vpack.c.b16 %v2180, %v2176
    %v2213 = vpack.c.b16 %v2181, %v2177
    %2246 = vmatprep.subr.bf16.mxu0 %v2211
    %2247 = vmatpush1.bf16.msra.mxu0 %v2210
    %2248 = vmatprep.subr.bf16.mxu0 %v2207
    %2249 = vmatpush1.bf16.msra.mxu0 %v2206
    %2250 = vmatprep.subr.bf16.mxu0 %v2203
    %2251 = vmatpush1.bf16.msra.mxu0 %v2202
    %2252 = vmatprep.subr.bf16.mxu0 %v2199
    %2253 = vmatpush1.bf16.msra.mxu0 %v2198
    %2254 = vmatprep.subr.bf16.mxu0 %v2195
    %2255 = vmatpush1.bf16.msra.mxu0 %v2194
    %2256 = vmatprep.subr.bf16.mxu0 %v2191
    %2257 = vmatpush1.bf16.msra.mxu0 %v2190
    %2258 = vmatprep.subr.bf16.mxu0 %v2187
    %2259 = vmatpush1.bf16.msra.mxu0 %v2186
    %2260 = vmatprep.subr.bf16.mxu0 %v2183
    %2261 = vmatpush1.bf16.msra.mxu0 %v2182
    %2262 = vmatprep.subr.bf16.mxu0 0
    %2263 = vmatpush2.bf16.msra.mxu0 0
    %2264 = vmatprep.subr.bf16.mxu0 0
    %2265 = vmatpush2.bf16.msra.mxu0 0
    %2266 = vmatprep.subr.bf16.mxu0 0
    %2267 = vmatpush2.bf16.msra.mxu0 0
    %2268 = vmatprep.subr.bf16.mxu0 0
    %2269 = vmatpush2.bf16.msra.mxu0 0
    %2270 = vmatprep.subr.bf16.mxu0 0
    %2271 = vmatpush2.bf16.msra.mxu0 0
    %2272 = vmatprep.subr.bf16.mxu0 0
    %2273 = vmatpush2.bf16.msra.mxu0 0
    %2274 = vmatprep.subr.bf16.mxu0 0
    %2275 = vmatpush2.bf16.msra.mxu0 0
    %2276 = vmatprep.subr.bf16.mxu0 0
    %2277 = vmatpush2.bf16.msra.mxu0 0
    %2278 = vmatprep.mubr.bf16.mxu0 0
    %2279 = vmatmul.mubr.bf16.gmra.mxu0 %v2053
    %v2280 = vpop.f32.mrf.mxu0
    %v2281 = vadd.f32 0.0, %v2280
    %v2282 = vpop.f32.mrf.mxu0
    %v2283 = vadd.f32 0.0, %v2282
    %v2284 = vpop.f32.mrf.mxu0
    %v2285 = vpop.f32.mrf.mxu0
    %2286 = vdwg.mxu0
    %2287 = vmatprep.subr.bf16.mxu0 %v2213
    %2288 = vmatpush1.bf16.msra.mxu0 %v2212
    %2289 = vmatprep.subr.bf16.mxu0 %v2209
    %2290 = vmatpush1.bf16.msra.mxu0 %v2208
    %2291 = vmatprep.subr.bf16.mxu0 %v2205
    %2292 = vmatpush1.bf16.msra.mxu0 %v2204
    %2293 = vmatprep.subr.bf16.mxu0 %v2201
    %2294 = vmatpush1.bf16.msra.mxu0 %v2200
    %2295 = vmatprep.subr.bf16.mxu0 %v2197
    %2296 = vmatpush1.bf16.msra.mxu0 %v2196
    %2297 = vmatprep.subr.bf16.mxu0 %v2193
    %2298 = vmatpush1.bf16.msra.mxu0 %v2192
    %2299 = vmatprep.subr.bf16.mxu0 %v2189
    %2300 = vmatpush1.bf16.msra.mxu0 %v2188
    %2301 = vmatprep.subr.bf16.mxu0 %v2185
    %2302 = vmatpush1.bf16.msra.mxu0 %v2184
    %2303 = vmatprep.subr.bf16.mxu0 0
    %2304 = vmatpush2.bf16.msra.mxu0 0
    %2305 = vmatprep.subr.bf16.mxu0 0
    %2306 = vmatpush2.bf16.msra.mxu0 0
    %2307 = vmatprep.subr.bf16.mxu0 0
    %2308 = vmatpush2.bf16.msra.mxu0 0
    %2309 = vmatprep.subr.bf16.mxu0 0
    %2310 = vmatpush2.bf16.msra.mxu0 0
    %2311 = vmatprep.subr.bf16.mxu0 0
    %2312 = vmatpush2.bf16.msra.mxu0 0
    %2313 = vmatprep.subr.bf16.mxu0 0
    %2314 = vmatpush2.bf16.msra.mxu0 0
    %2315 = vmatprep.subr.bf16.mxu0 0
    %2316 = vmatpush2.bf16.msra.mxu0 0
    %2317 = vmatprep.subr.bf16.mxu0 0
    %2318 = vmatpush2.bf16.msra.mxu0 0
    %2319 = vmatprep.mubr.bf16.mxu0 0
    %2320 = vmatmul.mubr.bf16.gmra.mxu0 %v2053
    %v2321 = vpop.f32.mrf.mxu0
    %v2322 = vadd.f32 0.0, %v2321
    %v2323 = vpop.f32.mrf.mxu0
    %v2324 = vadd.f32 0.0, %v2323
    %v2325 = vpop.f32.mrf.mxu0
    %v2326 = vpop.f32.mrf.mxu0
    %2327 = vdwg.mxu0
    %v2328 = vadd.f32 %v2049, %v2281
    %v2329 = vadd.f32 %v2050, %v2283
    %v2330 = vadd.f32 %v2051, %v2322
    %v2331 = vadd.f32 %v2052, %v2324
    %v2332 = vmul.f32 %v2328, 0.5
    %v2333 = vtanh.pop %v2332
    %v2334 = vmul.f32 %v2333, 0.5
    %v2335 = vadd.f32 %v2334, 0.5
    %v2336 = vmul.f32 %v2329, 0.5
    %v2337 = vtanh.pop %v2336
    %v2338 = vmul.f32 %v2337, 0.5
    %v2339 = vadd.f32 %v2338, 0.5
    %v2340 = vtanh.pop %v2330
    %v2341 = vmul.f32 %v2331, 0.5
    %v2342 = vtanh.pop %v2341
    %v2343 = vmul.f32 %v2342, 0.5
    %v2344 = vadd.f32 %v2343, 0.5
    %v2345 = vmul.f32 %v2339, %v2023
    %v2346 = vmul.f32 %v2335, %v2340
    %v2347 = vadd.f32 %v2345, %v2346
    %v2348 = vtanh.pop %v2347
    %v2349 = vmul.f32 %v2344, %v2348
    %v2350 = vmul.f32 %v2349, %v399
    %v2351 = vsel %vm402, %v2350, 0.0
    %2352 = vadd.xlane.f32.xlu0 %v2351
    %v2353 = vpop.xlane.xlu0 %2352
    %v2354 = vadd.f32 %v2353, %v406
    %v2356 = vlaneseq
    %v2357 = vshrl.u32 %v2356, 7
    %v2358 = vsub.s32 %v410, %v2357
    %v2359 = vrot.slane %v2354, %v2358
    %2361 = vst.msk [vmem:[%s6 + $0x6] sm:$0x1] %vm416, %v2359
    %s2362 = scalar_lea.vmem %s0, 14
    %v2363 = vld [vmem:[%s2362] sm:$0x3]
    %2365 = vset.pattern.permute.xlu0 0
    %2366 = vperm.xlu0 %2365, %v2363
    %v2367 = vpop.permute.xlu0 %2366
    %v2369 = vmul.f32 %v2367, %v53
    %v2370 = vmul.f32 %v2367, %v57
    %v2371 = vmul.f32 %v2367, %v61
    %v2372 = vmul.f32 %v2367, %v65
    %v2373 = vadd.f32 %v2369, %v78
    %v2374 = vadd.f32 %v2370, %v82
    %v2375 = vadd.f32 %v2371, %v86
    %v2376 = vadd.f32 %v2372, %v90
    %v2377 = vpack.c.bf16 %v2349, %v2349
    %v2378 = vld [vmem:[#allocation3] sm:$0xff]
    %v2379 = vld [vmem:[#allocation3 + $0x8] sm:$0xff]
    %v2380 = vld [vmem:[#allocation3 + $0x10] sm:$0xff]
    %v2381 = vld [vmem:[#allocation3 + $0x18] sm:$0xff]
    %v2382 = vld [vmem:[#allocation3 + $0x20] sm:$0xff]
    %v2383 = vld [vmem:[#allocation3 + $0x28] sm:$0xff]
    %v2384 = vld [vmem:[#allocation3 + $0x30] sm:$0xff]
    %v2385 = vld [vmem:[#allocation3 + $0x38] sm:$0xff]
    %v2386 = vld [vmem:[#allocation3 + $0x40] sm:$0xff]
    %v2387 = vld [vmem:[#allocation3 + $0x48] sm:$0xff]
    %v2388 = vld [vmem:[#allocation3 + $0x50] sm:$0xff]
    %v2389 = vld [vmem:[#allocation3 + $0x58] sm:$0xff]
    %v2390 = vld [vmem:[#allocation3 + $0x60] sm:$0xff]
    %v2391 = vld [vmem:[#allocation3 + $0x68] sm:$0xff]
    %v2392 = vld [vmem:[#allocation3 + $0x70] sm:$0xff]
    %v2393 = vld [vmem:[#allocation3 + $0x78] sm:$0xff]
    %v2394 = vld [vmem:[#allocation3 + $0x80] sm:$0xff]
    %v2395 = vld [vmem:[#allocation3 + $0x88] sm:$0xff]
    %v2396 = vld [vmem:[#allocation3 + $0x90] sm:$0xff]
    %v2397 = vld [vmem:[#allocation3 + $0x98] sm:$0xff]
    %v2398 = vld [vmem:[#allocation3 + $0xa0] sm:$0xff]
    %v2399 = vld [vmem:[#allocation3 + $0xa8] sm:$0xff]
    %v2400 = vld [vmem:[#allocation3 + $0xb0] sm:$0xff]
    %v2401 = vld [vmem:[#allocation3 + $0xb8] sm:$0xff]
    %v2402 = vld [vmem:[#allocation3 + $0xc0] sm:$0xff]
    %v2403 = vld [vmem:[#allocation3 + $0xc8] sm:$0xff]
    %v2404 = vld [vmem:[#allocation3 + $0xd0] sm:$0xff]
    %v2405 = vld [vmem:[#allocation3 + $0xd8] sm:$0xff]
    %v2406 = vld [vmem:[#allocation3 + $0xe0] sm:$0xff]
    %v2407 = vld [vmem:[#allocation3 + $0xe8] sm:$0xff]
    %v2408 = vld [vmem:[#allocation3 + $0xf0] sm:$0xff]
    %v2409 = vld [vmem:[#allocation3 + $0xf8] sm:$0xff]
    %v2442 = vunpack.c.l.b16 %v2378
    %v2443 = vunpack.c.h.b16 %v2378
    %v2444 = vunpack.c.l.b16 %v2379
    %v2445 = vunpack.c.h.b16 %v2379
    %v2446 = vunpack.c.l.b16 %v2380
    %v2447 = vunpack.c.h.b16 %v2380
    %v2448 = vunpack.c.l.b16 %v2381
    %v2449 = vunpack.c.h.b16 %v2381
    %v2450 = vunpack.c.l.b16 %v2382
    %v2451 = vunpack.c.h.b16 %v2382
    %v2452 = vunpack.c.l.b16 %v2383
    %v2453 = vunpack.c.h.b16 %v2383
    %v2454 = vunpack.c.l.b16 %v2384
    %v2455 = vunpack.c.h.b16 %v2384
    %v2456 = vunpack.c.l.b16 %v2385
    %v2457 = vunpack.c.h.b16 %v2385
    %v2458 = vunpack.c.l.b16 %v2386
    %v2459 = vunpack.c.h.b16 %v2386
    %v2460 = vunpack.c.l.b16 %v2387
    %v2461 = vunpack.c.h.b16 %v2387
    %v2462 = vunpack.c.l.b16 %v2388
    %v2463 = vunpack.c.h.b16 %v2388
    %v2464 = vunpack.c.l.b16 %v2389
    %v2465 = vunpack.c.h.b16 %v2389
    %v2466 = vunpack.c.l.b16 %v2390
    %v2467 = vunpack.c.h.b16 %v2390
    %v2468 = vunpack.c.l.b16 %v2391
    %v2469 = vunpack.c.h.b16 %v2391
    %v2470 = vunpack.c.l.b16 %v2392
    %v2471 = vunpack.c.h.b16 %v2392
    %v2472 = vunpack.c.l.b16 %v2393
    %v2473 = vunpack.c.h.b16 %v2393
    %v2474 = vunpack.c.l.b16 %v2394
    %v2475 = vunpack.c.h.b16 %v2394
    %v2476 = vunpack.c.l.b16 %v2395
    %v2477 = vunpack.c.h.b16 %v2395
    %v2478 = vunpack.c.l.b16 %v2396
    %v2479 = vunpack.c.h.b16 %v2396
    %v2480 = vunpack.c.l.b16 %v2397
    %v2481 = vunpack.c.h.b16 %v2397
    %v2482 = vunpack.c.l.b16 %v2398
    %v2483 = vunpack.c.h.b16 %v2398
    %v2484 = vunpack.c.l.b16 %v2399
    %v2485 = vunpack.c.h.b16 %v2399
    %v2486 = vunpack.c.l.b16 %v2400
    %v2487 = vunpack.c.h.b16 %v2400
    %v2488 = vunpack.c.l.b16 %v2401
    %v2489 = vunpack.c.h.b16 %v2401
    %v2490 = vunpack.c.l.b16 %v2402
    %v2491 = vunpack.c.h.b16 %v2402
    %v2492 = vunpack.c.l.b16 %v2403
    %v2493 = vunpack.c.h.b16 %v2403
    %v2494 = vunpack.c.l.b16 %v2404
    %v2495 = vunpack.c.h.b16 %v2404
    %v2496 = vunpack.c.l.b16 %v2405
    %v2497 = vunpack.c.h.b16 %v2405
    %v2498 = vunpack.c.l.b16 %v2406
    %v2499 = vunpack.c.h.b16 %v2406
    %v2500 = vunpack.c.l.b16 %v2407
    %v2501 = vunpack.c.h.b16 %v2407
    %v2502 = vunpack.c.l.b16 %v2408
    %v2503 = vunpack.c.h.b16 %v2408
    %v2504 = vunpack.c.l.b16 %v2409
    %v2505 = vunpack.c.h.b16 %v2409
    %v2506 = vpack.c.b16 %v2446, %v2442
    %v2507 = vpack.c.b16 %v2447, %v2443
    %v2508 = vpack.c.b16 %v2448, %v2444
    %v2509 = vpack.c.b16 %v2449, %v2445
    %v2510 = vpack.c.b16 %v2454, %v2450
    %v2511 = vpack.c.b16 %v2455, %v2451
    %v2512 = vpack.c.b16 %v2456, %v2452
    %v2513 = vpack.c.b16 %v2457, %v2453
    %v2514 = vpack.c.b16 %v2462, %v2458
    %v2515 = vpack.c.b16 %v2463, %v2459
    %v2516 = vpack.c.b16 %v2464, %v2460
    %v2517 = vpack.c.b16 %v2465, %v2461
    %v2518 = vpack.c.b16 %v2470, %v2466
    %v2519 = vpack.c.b16 %v2471, %v2467
    %v2520 = vpack.c.b16 %v2472, %v2468
    %v2521 = vpack.c.b16 %v2473, %v2469
    %v2522 = vpack.c.b16 %v2478, %v2474
    %v2523 = vpack.c.b16 %v2479, %v2475
    %v2524 = vpack.c.b16 %v2480, %v2476
    %v2525 = vpack.c.b16 %v2481, %v2477
    %v2526 = vpack.c.b16 %v2486, %v2482
    %v2527 = vpack.c.b16 %v2487, %v2483
    %v2528 = vpack.c.b16 %v2488, %v2484
    %v2529 = vpack.c.b16 %v2489, %v2485
    %v2530 = vpack.c.b16 %v2494, %v2490
    %v2531 = vpack.c.b16 %v2495, %v2491
    %v2532 = vpack.c.b16 %v2496, %v2492
    %v2533 = vpack.c.b16 %v2497, %v2493
    %v2534 = vpack.c.b16 %v2502, %v2498
    %v2535 = vpack.c.b16 %v2503, %v2499
    %v2536 = vpack.c.b16 %v2504, %v2500
    %v2537 = vpack.c.b16 %v2505, %v2501
    %2570 = vmatprep.subr.bf16.mxu0 %v2535
    %2571 = vmatpush1.bf16.msra.mxu0 %v2534
    %2572 = vmatprep.subr.bf16.mxu0 %v2531
    %2573 = vmatpush1.bf16.msra.mxu0 %v2530
    %2574 = vmatprep.subr.bf16.mxu0 %v2527
    %2575 = vmatpush1.bf16.msra.mxu0 %v2526
    %2576 = vmatprep.subr.bf16.mxu0 %v2523
    %2577 = vmatpush1.bf16.msra.mxu0 %v2522
    %2578 = vmatprep.subr.bf16.mxu0 %v2519
    %2579 = vmatpush1.bf16.msra.mxu0 %v2518
    %2580 = vmatprep.subr.bf16.mxu0 %v2515
    %2581 = vmatpush1.bf16.msra.mxu0 %v2514
    %2582 = vmatprep.subr.bf16.mxu0 %v2511
    %2583 = vmatpush1.bf16.msra.mxu0 %v2510
    %2584 = vmatprep.subr.bf16.mxu0 %v2507
    %2585 = vmatpush1.bf16.msra.mxu0 %v2506
    %2586 = vmatprep.subr.bf16.mxu0 0
    %2587 = vmatpush2.bf16.msra.mxu0 0
    %2588 = vmatprep.subr.bf16.mxu0 0
    %2589 = vmatpush2.bf16.msra.mxu0 0
    %2590 = vmatprep.subr.bf16.mxu0 0
    %2591 = vmatpush2.bf16.msra.mxu0 0
    %2592 = vmatprep.subr.bf16.mxu0 0
    %2593 = vmatpush2.bf16.msra.mxu0 0
    %2594 = vmatprep.subr.bf16.mxu0 0
    %2595 = vmatpush2.bf16.msra.mxu0 0
    %2596 = vmatprep.subr.bf16.mxu0 0
    %2597 = vmatpush2.bf16.msra.mxu0 0
    %2598 = vmatprep.subr.bf16.mxu0 0
    %2599 = vmatpush2.bf16.msra.mxu0 0
    %2600 = vmatprep.subr.bf16.mxu0 0
    %2601 = vmatpush2.bf16.msra.mxu0 0
    %2602 = vmatprep.mubr.bf16.mxu0 0
    %2603 = vmatmul.mubr.bf16.gmra.mxu0 %v2377
    %v2604 = vpop.f32.mrf.mxu0
    %v2605 = vadd.f32 0.0, %v2604
    %v2606 = vpop.f32.mrf.mxu0
    %v2607 = vadd.f32 0.0, %v2606
    %v2608 = vpop.f32.mrf.mxu0
    %v2609 = vpop.f32.mrf.mxu0
    %2610 = vdwg.mxu0
    %2611 = vmatprep.subr.bf16.mxu0 %v2537
    %2612 = vmatpush1.bf16.msra.mxu0 %v2536
    %2613 = vmatprep.subr.bf16.mxu0 %v2533
    %2614 = vmatpush1.bf16.msra.mxu0 %v2532
    %2615 = vmatprep.subr.bf16.mxu0 %v2529
    %2616 = vmatpush1.bf16.msra.mxu0 %v2528
    %2617 = vmatprep.subr.bf16.mxu0 %v2525
    %2618 = vmatpush1.bf16.msra.mxu0 %v2524
    %2619 = vmatprep.subr.bf16.mxu0 %v2521
    %2620 = vmatpush1.bf16.msra.mxu0 %v2520
    %2621 = vmatprep.subr.bf16.mxu0 %v2517
    %2622 = vmatpush1.bf16.msra.mxu0 %v2516
    %2623 = vmatprep.subr.bf16.mxu0 %v2513
    %2624 = vmatpush1.bf16.msra.mxu0 %v2512
    %2625 = vmatprep.subr.bf16.mxu0 %v2509
    %2626 = vmatpush1.bf16.msra.mxu0 %v2508
    %2627 = vmatprep.subr.bf16.mxu0 0
    %2628 = vmatpush2.bf16.msra.mxu0 0
    %2629 = vmatprep.subr.bf16.mxu0 0
    %2630 = vmatpush2.bf16.msra.mxu0 0
    %2631 = vmatprep.subr.bf16.mxu0 0
    %2632 = vmatpush2.bf16.msra.mxu0 0
    %2633 = vmatprep.subr.bf16.mxu0 0
    %2634 = vmatpush2.bf16.msra.mxu0 0
    %2635 = vmatprep.subr.bf16.mxu0 0
    %2636 = vmatpush2.bf16.msra.mxu0 0
    %2637 = vmatprep.subr.bf16.mxu0 0
    %2638 = vmatpush2.bf16.msra.mxu0 0
    %2639 = vmatprep.subr.bf16.mxu0 0
    %2640 = vmatpush2.bf16.msra.mxu0 0
    %2641 = vmatprep.subr.bf16.mxu0 0
    %2642 = vmatpush2.bf16.msra.mxu0 0
    %2643 = vmatprep.mubr.bf16.mxu0 0
    %2644 = vmatmul.mubr.bf16.gmra.mxu0 %v2377
    %v2645 = vpop.f32.mrf.mxu0
    %v2646 = vadd.f32 0.0, %v2645
    %v2647 = vpop.f32.mrf.mxu0
    %v2648 = vadd.f32 0.0, %v2647
    %v2649 = vpop.f32.mrf.mxu0
    %v2650 = vpop.f32.mrf.mxu0
    %2651 = vdwg.mxu0
    %v2652 = vadd.f32 %v2373, %v2605
    %v2653 = vadd.f32 %v2374, %v2607
    %v2654 = vadd.f32 %v2375, %v2646
    %v2655 = vadd.f32 %v2376, %v2648
    %v2656 = vmul.f32 %v2652, 0.5
    %v2657 = vtanh.pop %v2656
    %v2658 = vmul.f32 %v2657, 0.5
    %v2659 = vadd.f32 %v2658, 0.5
    %v2660 = vmul.f32 %v2653, 0.5
    %v2661 = vtanh.pop %v2660
    %v2662 = vmul.f32 %v2661, 0.5
    %v2663 = vadd.f32 %v2662, 0.5
    %v2664 = vtanh.pop %v2654
    %v2665 = vmul.f32 %v2655, 0.5
    %v2666 = vtanh.pop %v2665
    %v2667 = vmul.f32 %v2666, 0.5
    %v2668 = vadd.f32 %v2667, 0.5
    %v2669 = vmul.f32 %v2663, %v2347
    %v2670 = vmul.f32 %v2659, %v2664
    %v2671 = vadd.f32 %v2669, %v2670
    %v2672 = vtanh.pop %v2671
    %v2673 = vmul.f32 %v2668, %v2672
    %v2674 = vmul.f32 %v2673, %v399
    %v2675 = vsel %vm402, %v2674, 0.0
    %2676 = vadd.xlane.f32.xlu0 %v2675
    %v2677 = vpop.xlane.xlu0 %2676
    %v2678 = vadd.f32 %v2677, %v406
    %v2680 = vlaneseq
    %v2681 = vshrl.u32 %v2680, 7
    %v2682 = vsub.s32 %v410, %v2681
    %v2683 = vrot.slane %v2678, %v2682
    %2685 = vst.msk [vmem:[%s6 + $0x7] sm:$0x1] %vm416, %v2683
    // Predicated region
    $region30: #{baseline_model_forward.1} parent=1 // pred_check
      _
    $region31: #{baseline_model_forward.1} parent=1 // pred_check_branch
      %2687 = sbr.rel (0) target = $region33
    $region32: #{baseline_model_forward.1} parent=1 // pred_region
      _
    $region33: #{baseline_model_forward.1} parent=1 // pred_fallthru
      _
    // Predicated region
    $region34: #{baseline_model_forward.1} parent=1 // pred_check
      _
    $region35: #{baseline_model_forward.1} parent=1 // pred_check_branch
      %2689 = sbr.rel (0) target = $region37
    $region36: #{baseline_model_forward.1} parent=1 // pred_region
      _
    $region37: #{baseline_model_forward.1} parent=1 // pred_fallthru
      _
    %2690 = vsyncpa [#allocation4], 1

</llo_original>
